<compile_context>
chip_gen: v7x
topology: tpu7x:2x2x1
jax: 0.10.0
libtpu: 0.0.40
codegen_flags: <defaults>
</compile_context>

<pallas_src>
import jax
import jax.numpy as jnp
from jax.experimental import pallas as pl
from jax.experimental.pallas import tpu as pltpu

EPS = 1e-5


def _vmem_limit_bytes():
    # ~100 MiB on v5e/v6e (128 MiB physical VMEM), ~48 MiB on v7x (64 MiB physical).
    try:
        cap = int(pltpu.get_tpu_info().vmem_capacity_bytes)
    except Exception:
        cap = 64 * 1024 * 1024
    return max(min(cap - 16 * 1024 * 1024, 100 * 1024 * 1024), 32 * 1024 * 1024)


_VMEM_LIMIT = _vmem_limit_bytes()


# --------------------------------------------------------------------------------------
# Kernels
# --------------------------------------------------------------------------------------
def _make_conv_stats_kernel(TH, H, R, pre_bn):
    """[optional fused BN+ReLU of the packed input] -> 3x3 conv (banded matmuls, no bias)
    -> per-(n, r) partial BN stats.  All tensors are in packed (rows, W*C) layout."""

    def kernel(*refs):
        if pre_bn:
            x_ref, w_ref, scale_ref, shift_ref, y_ref, stats_ref = refs
        else:
            x_ref, w_ref, y_ref, stats_ref = refs

        wc_in = x_ref.shape[-1]

        def bn_relu(v):
            if pre_bn:
                return jnp.maximum(v * scale_ref[...] + shift_ref[...], 0.0)
            return v

        if R == 1:
            # Whole image per step: fully static, no dynamic slices.
            slab = bn_relu(x_ref[...].astype(jnp.float32))                 # (TH, W*Cin)
            zrow = jnp.zeros((1, wc_in), jnp.float32)
            top_halo = zrow                                                # zero padding
            bot_halo = zrow
        else:
            r = pl.program_id(1)
            row0 = pl.multiple_of(r * TH, TH)
            slab = bn_relu(x_ref[pl.ds(row0, TH)].astype(jnp.float32))
            top = bn_relu(x_ref[pl.ds(jnp.maximum(row0 - 1, 0), 1)].astype(jnp.float32))
            bot = bn_relu(x_ref[pl.ds(jnp.minimum(row0 + TH, H - 1), 1)].astype(jnp.float32))
            # Out-of-image halo rows are the conv's zero padding (applied post-BN/ReLU).
            top_halo = jnp.where(row0 >= 1, top, 0.0)
            bot_halo = jnp.where(row0 + TH <= H - 1, bot, 0.0)

        # Vertically shifted slabs: up[h] = input row (row0+h-1), down[h] = (row0+h+1).
        up = jnp.concatenate([top_halo, slab[:TH - 1]], axis=0)
        down = jnp.concatenate([slab[1:], bot_halo], axis=0)

        # 3x3 conv == 3 accumulating MXU matmuls against banded (dx,ci)->(w,co) weights;
        # horizontal zero padding is already encoded in the band matrices.
        acc = jnp.dot(up.astype(jnp.bfloat16), w_ref[0],
                      preferred_element_type=jnp.float32)
        acc = acc + jnp.dot(slab.astype(jnp.bfloat16), w_ref[1],
                            preferred_element_type=jnp.float32)
        acc = acc + jnp.dot(down.astype(jnp.bfloat16), w_ref[2],
                            preferred_element_type=jnp.float32)

        # Per-(n, r) partial batch statistics, kept in the packed lane layout (f32);
        # the per-channel fold happens in a tiny JAX reduction outside the kernel.
        stats_ref[...] = jnp.concatenate(
            [jnp.sum(acc, axis=0, keepdims=True),
             jnp.sum(acc * acc, axis=0, keepdims=True)], axis=0)

        y_ref[...] = acc.astype(y_ref.dtype)                               # lane-dense store

    return kernel


def _bn_relu_kernel(y_ref, scale_ref, shift_ref, o_ref):
    y = y_ref[...].astype(jnp.float32)
    o_ref[...] = jnp.maximum(y * scale_ref[...] + shift_ref[...], 0.0).astype(o_ref.dtype)


# --------------------------------------------------------------------------------------
# pallas_call wrappers
# --------------------------------------------------------------------------------------
def _conv_stats(x, w_band, scale=None, shift=None, *, row_tile):
    """Raw 3x3 conv (+ optional fused input BN/ReLU) + per-(n, r) BN partial stats.

    x:      (N, H, W*Cin)  bf16 packed
    w_band: (3, W*Cin, W*Cout) bf16 banded weights
    """
    N, H, wc_in = x.shape
    wc_out = w_band.shape[-1]
    TH = row_tile if (H % row_tile == 0) else H
    R = H // TH
    pre_bn = scale is not None

    kernel = _make_conv_stats_kernel(TH, H, R, pre_bn)
    in_specs = [
        pl.BlockSpec((None, H, wc_in), lambda n, r: (n, 0, 0)),
        pl.BlockSpec((3, wc_in, wc_out), lambda n, r: (0, 0, 0)),
    ]
    args = [x, w_band]
    if pre_bn:
        in_specs += [pl.BlockSpec((1, wc_in), lambda n, r: (0, 0)),
                     pl.BlockSpec((1, wc_in), lambda n, r: (0, 0))]
        args += [scale, shift]

    y, stats = pl.pallas_call(
        kernel,
        grid=(N, R),
        in_specs=in_specs,
        out_specs=(
            pl.BlockSpec((None, TH, wc_out), lambda n, r: (n, r, 0)),
            pl.BlockSpec((None, None, 2, wc_out), lambda n, r: (n, r, 0, 0)),
        ),
        out_shape=(
            jax.ShapeDtypeStruct((N, H, wc_out), jnp.bfloat16),
            jax.ShapeDtypeStruct((N, R, 2, wc_out), jnp.float32),
        ),
        compiler_params=pltpu.CompilerParams(
            dimension_semantics=("parallel", "parallel"),
            vmem_limit_bytes=_VMEM_LIMIT),
    )(*args)
    return y, stats


def _bn_relu(y, scale, shift, *, row_tile):
    N, H, wc = y.shape
    TH = row_tile if (H % row_tile == 0) else H
    R = H // TH
    return pl.pallas_call(
        _bn_relu_kernel,
        grid=(N, R),
        in_specs=[pl.BlockSpec((None, TH, wc), lambda n, r: (n, r, 0)),
                  pl.BlockSpec((1, wc), lambda n, r: (0, 0)),
                  pl.BlockSpec((1, wc), lambda n, r: (0, 0))],
        out_specs=pl.BlockSpec((None, TH, wc), lambda n, r: (n, r, 0)),
        out_shape=jax.ShapeDtypeStruct((N, H, wc), jnp.float32),
        compiler_params=pltpu.CompilerParams(
            dimension_semantics=("parallel", "parallel"),
            vmem_limit_bytes=_VMEM_LIMIT),
    )(y, scale, shift)


# --------------------------------------------------------------------------------------
# Parameter preprocessing / BN affine fold (tiny JAX ops)
# --------------------------------------------------------------------------------------
def _band_weights(w_hwio, W):
    """(3, 3, Cin, Cout) HWIO -> three banded (W*Cin, W*Cout) matrices (one per dy).

    M[dy, win*Cin+ci, wout*Cout+co] = w[dy, win-wout+1, ci, co] when 0 <= win-wout+1 <= 2,
    else 0 -- this encodes both the dx taps and the horizontal zero padding."""
    _, _, cin, cout = w_hwio.shape
    win = jnp.arange(W)[:, None]
    wout = jnp.arange(W)[None, :]
    dx = win - wout + 1                                   # (W, W)
    valid = (dx >= 0) & (dx <= 2)
    wg = w_hwio[:, jnp.clip(dx, 0, 2)]                    # (3, W, W, Cin, Cout)
    wg = jnp.where(valid[None, :, :, None, None], wg, 0.0)
    m = jnp.transpose(wg, (0, 1, 3, 2, 4)).reshape(3, W * cin, W * cout)
    return m.astype(jnp.bfloat16)


def _bn_affine(stats, gamma, beta, count, W):
    """Fold per-(n, r) packed-lane (sum, sumsq) partials into packed (scale, shift)."""
    C = gamma.shape[0]
    tot = stats.reshape(-1, 2, W, C).sum(axis=(0, 2))     # (2, C)
    mean = tot[0] / count
    var = jnp.maximum(tot[1] / count - mean * mean, 0.0)
    scale = gamma * jax.lax.rsqrt(var + EPS)
    shift = beta - mean * scale
    scale_p = jnp.tile(scale, W).reshape(1, W * C).astype(jnp.float32)
    shift_p = jnp.tile(shift, W).reshape(1, W * C).astype(jnp.float32)
    return scale_p, shift_p


def double_conv(x_nchw, params, row_tile=16):
    """Pallas DoubleConv forward (NCHW in -> NCHW out), training-mode BatchNorm."""
    N, Cin, H, W = x_nchw.shape
    x = jnp.transpose(x_nchw, (0, 2, 3, 1)).reshape(N, H, W * Cin).astype(jnp.bfloat16)

    w1 = params["w1"]                                     # (3, 3, Cin, C1)  HWIO
    w2 = params["w2"]                                     # (3, 3, C1,  C2)
    C2 = w2.shape[-1]
    w1b = _band_weights(w1, W)                            # (3, W*Cin, W*C1)
    w2b = _band_weights(w2, W)                            # (3, W*C1,  W*C2)
    # NOTE: conv biases are mathematically cancelled by training-mode BN mean
    # subtraction, so they are intentionally not passed to the kernels.

    count = N * H * W
    y1, st1 = _conv_stats(x, w1b, row_tile=row_tile)                       # conv1 + stats1
    sc1, sh1 = _bn_affine(st1, params["g1"], params["be1"], count, W)
    # NOTE: BN1 scale/shift come from the f32 conv1 accumulator but are applied to the
    # bf16-rounded y1 re-read from HBM (covered by the test tolerance).
    y2, st2 = _conv_stats(y1, w2b, sc1, sh1, row_tile=row_tile)            # BN1+ReLU+conv2+stats2
    sc2, sh2 = _bn_affine(st2, params["g2"], params["be2"], count, W)
    out = _bn_relu(y2, sc2, sh2, row_tile=row_tile)                        # BN2+ReLU (f32)
    return jnp.transpose(out.reshape(N, H, W, C2), (0, 3, 1, 2))           # packed -> NCHW


# --------------------------------------------------------------------------------------
# Pure-JAX f32 reference (PyTorch semantics) for the correctness check
# --------------------------------------------------------------------------------------
def _ref_stage(x_nchw, w_oihw, bias, gamma, beta):
    y = jax.lax.conv_general_dilated(
        x_nchw, w_oihw, window_strides=(1, 1),
        padding=((1, 1), (1, 1)),
        dimension_numbers=("NCHW", "OIHW", "NCHW"))
    y = y + bias[None, :, None, None]
    mean = jnp.mean(y, axis=(0, 2, 3), keepdims=True)
    var = jnp.mean((y - mean) ** 2, axis=(0, 2, 3), keepdims=True)
    y = (y - mean) * jax.lax.rsqrt(var + EPS)
    y = y * gamma[None, :, None, None] + beta[None, :, None, None]
    return jnp.maximum(y, 0.0)


def ref_double_conv(x_nchw, raw):
    y = _ref_stage(x_nchw, raw["w1_oihw"], raw["b1"], raw["g1"], raw["be1"])
    y = _ref_stage(y, raw["w2_oihw"], raw["b2"], raw["g2"], raw["be2"])
    return y


if __name__ == "__main__":
    # DoubleConv(input_channel=4, output_channel=8) at small spatial size.
    N, Cin, Cout, H, W = 2, 4, 8, 16, 16

    key = jax.random.PRNGKey(0)
    ks = jax.random.split(key, 9)
    x = jax.random.normal(ks[0], (N, Cin, H, W), jnp.float32)

    # PyTorch-shaped parameters (Conv2d weight is OIHW).
    w1_oihw = 0.1 * jax.random.normal(ks[1], (Cout, Cin, 3, 3), jnp.float32)
    b1 = 0.1 * jax.random.normal(ks[2], (Cout,), jnp.float32)
    g1 = 1.0 + 0.1 * jax.random.normal(ks[3], (Cout,), jnp.float32)
    be1 = 0.1 * jax.random.normal(ks[4], (Cout,), jnp.float32)
    w2_oihw = 0.1 * jax.random.normal(ks[5], (Cout, Cout, 3, 3), jnp.float32)
    b2 = 0.1 * jax.random.normal(ks[6], (Cout,), jnp.float32)
    g2 = 1.0 + 0.1 * jax.random.normal(ks[7], (Cout,), jnp.float32)
    be2 = 0.1 * jax.random.normal(ks[8], (Cout,), jnp.float32)

    params = {
        # kernels use HWIO layout; conv biases omitted (cancelled by BN)
        "w1": jnp.transpose(w1_oihw, (2, 3, 1, 0)), "g1": g1, "be1": be1,
        "w2": jnp.transpose(w2_oihw, (2, 3, 1, 0)), "g2": g2, "be2": be2,
    }
    raw = {"w1_oihw": w1_oihw, "b1": b1, "g1": g1, "be1": be1,
           "w2_oihw": w2_oihw, "b2": b2, "g2": g2, "be2": be2}

    fwd = jax.jit(lambda xx: double_conv(xx, params))
    out = jax.block_until_ready(fwd(x))
    ref = jax.block_until_ready(ref_double_conv(x, raw))

    assert out.shape == (N, Cout, H, W), out.shape
    max_err = float(jnp.max(jnp.abs(out - ref)))
    # bf16 activations/weights vs a full-f32 reference: expected worst-case error is a
    # few 1e-2 on O(1) BN outputs, so use a 5e-2 absolute tolerance.
    assert max_err < 5e-2, f"mismatch vs reference: {max_err}"

    print("KERNEL_OK")
</pallas_src>

<mosaic_0001>
module attributes {stable_mosaic.version = 11 : i64} {
  func.func @kernel(%arg0: i32, %arg1: i32, %arg2: memref<1x16x64xbf16, #tpu.memory_space<vmem>>, %arg3: memref<3x64x128xbf16, #tpu.memory_space<vmem>>, %arg4: memref<1x16x128xbf16, #tpu.memory_space<vmem>>, %arg5: memref<1x1x2x128xf32, #tpu.memory_space<vmem>>) attributes {dimension_semantics = [#tpu.dimension_semantics<parallel>, #tpu.dimension_semantics<parallel>], iteration_bounds = array<i64: 2, 1>, scalar_prefetch = 0 : i64, scratch_operands = 0 : i64, tpu.core_type = #tpu.core_type<tc>, window_params = [{transform_indices = @transform_0, window_bounds = array<i64: 1, 16, 64>}, {pipeline_mode = #tpu.pipeline_mode<synchronous>, transform_indices = @transform_1, window_bounds = array<i64: 3, 64, 128>}, {transform_indices = @transform_2, window_bounds = array<i64: 1, 16, 128>}, {transform_indices = @transform_3, window_bounds = array<i64: 1, 1, 2, 128>}]} {
    %c0 = arith.constant 0 : index
    %c0_0 = arith.constant 0 : index
    %c0_1 = arith.constant 0 : index
    %0 = vector.load %arg2[%c0, %c0_0, %c0_1] : memref<1x16x64xbf16, #tpu.memory_space<vmem>>, vector<1x16x64xbf16>
    %1 = vector.shape_cast %0 : vector<1x16x64xbf16> to vector<16x64xbf16>
    %2 = arith.extf %1 : vector<16x64xbf16> to vector<16x64xf32>
    %cst = arith.constant 0.000000e+00 : f32
    %3 = vector.broadcast %cst : f32 to vector<1x64xf32>
    %4 = vector.extract_strided_slice %2 {offsets = [0, 0], sizes = [15, 64], strides = [1, 1]} : vector<16x64xf32> to vector<15x64xf32>
    %5 = tpu.concatenate %3, %4 in 0 : vector<1x64xf32>, vector<15x64xf32> -> vector<16x64xf32>
    %6 = vector.extract_strided_slice %2 {offsets = [1, 0], sizes = [15, 64], strides = [1, 1]} : vector<16x64xf32> to vector<15x64xf32>
    %7 = tpu.concatenate %6, %3 in 0 : vector<15x64xf32>, vector<1x64xf32> -> vector<16x64xf32>
    %8 = arith.truncf %5 : vector<16x64xf32> to vector<16x64xbf16>
    %c0_2 = arith.constant 0 : index
    %c0_3 = arith.constant 0 : index
    %c0_4 = arith.constant 0 : index
    %9 = vector.load %arg3[%c0_2, %c0_3, %c0_4] : memref<3x64x128xbf16, #tpu.memory_space<vmem>>, vector<1x64x128xbf16>
    %10 = vector.shape_cast %9 : vector<1x64x128xbf16> to vector<64x128xbf16>
    %cst_5 = arith.constant dense<0.000000e+00> : vector<16x128xf32>
    %11 = tpu.matmul %8, %10, %cst_5 {dimension_numbers = #tpu.dot_dimension_numbers<[1], [0], [0], [1], [0, 0, 1, 1], [], []>} : vector<16x64xbf16>, vector<64x128xbf16>, vector<16x128xf32> -> vector<16x128xf32>
    %12 = arith.truncf %2 : vector<16x64xf32> to vector<16x64xbf16>
    %c1 = arith.constant 1 : index
    %c0_6 = arith.constant 0 : index
    %c0_7 = arith.constant 0 : index
    %13 = vector.load %arg3[%c1, %c0_6, %c0_7] : memref<3x64x128xbf16, #tpu.memory_space<vmem>>, vector<1x64x128xbf16>
    %14 = vector.shape_cast %13 : vector<1x64x128xbf16> to vector<64x128xbf16>
    %cst_8 = arith.constant dense<0.000000e+00> : vector<16x128xf32>
    %15 = tpu.matmul %12, %14, %cst_8 {dimension_numbers = #tpu.dot_dimension_numbers<[1], [0], [0], [1], [0, 0, 1, 1], [], []>} : vector<16x64xbf16>, vector<64x128xbf16>, vector<16x128xf32> -> vector<16x128xf32>
    %16 = arith.addf %11, %15 : vector<16x128xf32>
    %17 = arith.truncf %7 : vector<16x64xf32> to vector<16x64xbf16>
    %c2 = arith.constant 2 : index
    %c0_9 = arith.constant 0 : index
    %c0_10 = arith.constant 0 : index
    %18 = vector.load %arg3[%c2, %c0_9, %c0_10] : memref<3x64x128xbf16, #tpu.memory_space<vmem>>, vector<1x64x128xbf16>
    %19 = vector.shape_cast %18 : vector<1x64x128xbf16> to vector<64x128xbf16>
    %cst_11 = arith.constant dense<0.000000e+00> : vector<16x128xf32>
    %20 = tpu.matmul %17, %19, %cst_11 {dimension_numbers = #tpu.dot_dimension_numbers<[1], [0], [0], [1], [0, 0, 1, 1], [], []>} : vector<16x64xbf16>, vector<64x128xbf16>, vector<16x128xf32> -> vector<16x128xf32>
    %21 = arith.addf %16, %20 : vector<16x128xf32>
    %cst_12 = arith.constant dense<0.000000e+00> : vector<128xf32>
    %22 = vector.multi_reduction <add>, %21, %cst_12 [0] : vector<16x128xf32> to vector<128xf32>
    %23 = vector.shape_cast %22 : vector<128xf32> to vector<1x128xf32>
    %24 = arith.mulf %21, %21 : vector<16x128xf32>
    %cst_13 = arith.constant dense<0.000000e+00> : vector<128xf32>
    %25 = vector.multi_reduction <add>, %24, %cst_13 [0] : vector<16x128xf32> to vector<128xf32>
    %26 = vector.shape_cast %25 : vector<128xf32> to vector<1x128xf32>
    %27 = tpu.concatenate %23, %26 in 0 : vector<1x128xf32>, vector<1x128xf32> -> vector<2x128xf32>
    %c0_14 = arith.constant 0 : index
    %c0_15 = arith.constant 0 : index
    %c0_16 = arith.constant 0 : index
    %c0_17 = arith.constant 0 : index
    %28 = vector.load %arg5[%c0_14, %c0_15, %c0_16, %c0_17] : memref<1x1x2x128xf32, #tpu.memory_space<vmem>>, vector<1x1x2x128xf32>
    %29 = vector.shape_cast %28 : vector<1x1x2x128xf32> to vector<2x128xf32>
    %30 = vector.shape_cast %27 : vector<2x128xf32> to vector<1x1x2x128xf32>
    tpu.vector_store %arg5[%c0_14, %c0_15, %c0_16, %c0_17], %30 {strides = array<i32>} : memref<1x1x2x128xf32, #tpu.memory_space<vmem>>, vector<1x1x2x128xf32>,
    %31 = arith.truncf %21 : vector<16x128xf32> to vector<16x128xbf16>
    %c0_18 = arith.constant 0 : index
    %c0_19 = arith.constant 0 : index
    %c0_20 = arith.constant 0 : index
    %32 = vector.load %arg4[%c0_18, %c0_19, %c0_20] : memref<1x16x128xbf16, #tpu.memory_space<vmem>>, vector<1x16x128xbf16>
    %33 = vector.shape_cast %32 : vector<1x16x128xbf16> to vector<16x128xbf16>
    %34 = vector.shape_cast %31 : vector<16x128xbf16> to vector<1x16x128xbf16>
    tpu.vector_store %arg4[%c0_18, %c0_19, %c0_20], %34 {strides = array<i32>} : memref<1x16x128xbf16, #tpu.memory_space<vmem>>, vector<1x16x128xbf16>,
    return
  }
  func.func @transform_0(%arg0: i32, %arg1: i32) -> (i32, i32, i32) {
    %c0_i32 = arith.constant 0 : i32
    %c0_i32_0 = arith.constant 0 : i32
    %c0_i32_1 = arith.constant 0 : i32
    return %arg0, %c0_i32, %c0_i32_0 : i32, i32, i32
  }
  func.func @transform_1(%arg0: i32, %arg1: i32) -> (i32, i32, i32) {
    %c0_i32 = arith.constant 0 : i32
    %c0_i32_0 = arith.constant 0 : i32
    %c0_i32_1 = arith.constant 0 : i32
    %c0_i32_2 = arith.constant 0 : i32
    return %c0_i32, %c0_i32_0, %c0_i32_1 : i32, i32, i32
  }
  func.func @transform_2(%arg0: i32, %arg1: i32) -> (i32, i32, i32) {
    %c0_i32 = arith.constant 0 : i32
    %c0_i32_0 = arith.constant 0 : i32
    return %arg0, %arg1, %c0_i32 : i32, i32, i32
  }
  func.func @transform_3(%arg0: i32, %arg1: i32) -> (i32, i32, i32, i32) {
    %c0_i32 = arith.constant 0 : i32
    %c0_i32_0 = arith.constant 0 : i32
    %c0_i32_1 = arith.constant 0 : i32
    return %arg0, %arg1, %c0_i32, %c0_i32_0 : i32, i32, i32, i32
  }
}

module attributes {stable_mosaic.version = 11 : i64} {
  func.func @kernel(%arg0: i32, %arg1: i32, %arg2: memref<1x16x128xbf16, #tpu.memory_space<vmem>>, %arg3: memref<3x128x128xbf16, #tpu.memory_space<vmem>>, %arg4: memref<1x128xf32, #tpu.memory_space<vmem>>, %arg5: memref<1x128xf32, #tpu.memory_space<vmem>>, %arg6: memref<1x16x128xbf16, #tpu.memory_space<vmem>>, %arg7: memref<1x1x2x128xf32, #tpu.memory_space<vmem>>) attributes {dimension_semantics = [#tpu.dimension_semantics<parallel>, #tpu.dimension_semantics<parallel>], iteration_bounds = array<i64: 2, 1>, scalar_prefetch = 0 : i64, scratch_operands = 0 : i64, tpu.core_type = #tpu.core_type<tc>, window_params = [{transform_indices = @transform_0, window_bounds = array<i64: 1, 16, 128>}, {pipeline_mode = #tpu.pipeline_mode<synchronous>, transform_indices = @transform_1, window_bounds = array<i64: 3, 128, 128>}, {pipeline_mode = #tpu.pipeline_mode<synchronous>, transform_indices = @transform_2, window_bounds = array<i64: 1, 128>}, {pipeline_mode = #tpu.pipeline_mode<synchronous>, transform_indices = @transform_3, window_bounds = array<i64: 1, 128>}, {transform_indices = @transform_4, window_bounds = array<i64: 1, 16, 128>}, {transform_indices = @transform_5, window_bounds = array<i64: 1, 1, 2, 128>}]} {
    %c0 = arith.constant 0 : index
    %c0_0 = arith.constant 0 : index
    %c0_1 = arith.constant 0 : index
    %0 = vector.load %arg2[%c0, %c0_0, %c0_1] : memref<1x16x128xbf16, #tpu.memory_space<vmem>>, vector<1x16x128xbf16>
    %1 = vector.shape_cast %0 : vector<1x16x128xbf16> to vector<16x128xbf16>
    %2 = arith.extf %1 : vector<16x128xbf16> to vector<16x128xf32>
    %c0_2 = arith.constant 0 : index
    %c0_3 = arith.constant 0 : index
    %3 = vector.load %arg4[%c0_2, %c0_3] : memref<1x128xf32, #tpu.memory_space<vmem>>, vector<1x128xf32>
    %4 = vector.broadcast %3 : vector<1x128xf32> to vector<16x128xf32>
    %5 = arith.mulf %2, %4 : vector<16x128xf32>
    %c0_4 = arith.constant 0 : index
    %c0_5 = arith.constant 0 : index
    %6 = vector.load %arg5[%c0_4, %c0_5] : memref<1x128xf32, #tpu.memory_space<vmem>>, vector<1x128xf32>
    %7 = vector.broadcast %6 : vector<1x128xf32> to vector<16x128xf32>
    %8 = arith.addf %5, %7 : vector<16x128xf32>
    %cst = arith.constant 0.000000e+00 : f32
    %9 = vector.broadcast %cst : f32 to vector<16x128xf32>
    %10 = arith.maximumf %8, %9 : vector<16x128xf32>
    %cst_6 = arith.constant 0.000000e+00 : f32
    %11 = vector.broadcast %cst_6 : f32 to vector<1x128xf32>
    %12 = vector.extract_strided_slice %10 {offsets = [0, 0], sizes = [15, 128], strides = [1, 1]} : vector<16x128xf32> to vector<15x128xf32>
    %13 = tpu.concatenate %11, %12 in 0 : vector<1x128xf32>, vector<15x128xf32> -> vector<16x128xf32>
    %14 = vector.extract_strided_slice %10 {offsets = [1, 0], sizes = [15, 128], strides = [1, 1]} : vector<16x128xf32> to vector<15x128xf32>
    %15 = tpu.concatenate %14, %11 in 0 : vector<15x128xf32>, vector<1x128xf32> -> vector<16x128xf32>
    %16 = arith.truncf %13 : vector<16x128xf32> to vector<16x128xbf16>
    %c0_7 = arith.constant 0 : index
    %c0_8 = arith.constant 0 : index
    %c0_9 = arith.constant 0 : index
    %17 = vector.load %arg3[%c0_7, %c0_8, %c0_9] : memref<3x128x128xbf16, #tpu.memory_space<vmem>>, vector<1x128x128xbf16>
    %18 = vector.shape_cast %17 : vector<1x128x128xbf16> to vector<128x128xbf16>
    %cst_10 = arith.constant dense<0.000000e+00> : vector<16x128xf32>
    %19 = tpu.matmul %16, %18, %cst_10 {dimension_numbers = #tpu.dot_dimension_numbers<[1], [0], [0], [1], [0, 0, 1, 1], [], []>} : vector<16x128xbf16>, vector<128x128xbf16>, vector<16x128xf32> -> vector<16x128xf32>
    %20 = arith.truncf %10 : vector<16x128xf32> to vector<16x128xbf16>
    %c1 = arith.constant 1 : index
    %c0_11 = arith.constant 0 : index
    %c0_12 = arith.constant 0 : index
    %21 = vector.load %arg3[%c1, %c0_11, %c0_12] : memref<3x128x128xbf16, #tpu.memory_space<vmem>>, vector<1x128x128xbf16>
    %22 = vector.shape_cast %21 : vector<1x128x128xbf16> to vector<128x128xbf16>
    %cst_13 = arith.constant dense<0.000000e+00> : vector<16x128xf32>
    %23 = tpu.matmul %20, %22, %cst_13 {dimension_numbers = #tpu.dot_dimension_numbers<[1], [0], [0], [1], [0, 0, 1, 1], [], []>} : vector<16x128xbf16>, vector<128x128xbf16>, vector<16x128xf32> -> vector<16x128xf32>
    %24 = arith.addf %19, %23 : vector<16x128xf32>
    %25 = arith.truncf %15 : vector<16x128xf32> to vector<16x128xbf16>
    %c2 = arith.constant 2 : index
    %c0_14 = arith.constant 0 : index
    %c0_15 = arith.constant 0 : index
    %26 = vector.load %arg3[%c2, %c0_14, %c0_15] : memref<3x128x128xbf16, #tpu.memory_space<vmem>>, vector<1x128x128xbf16>
    %27 = vector.shape_cast %26 : vector<1x128x128xbf16> to vector<128x128xbf16>
    %cst_16 = arith.constant dense<0.000000e+00> : vector<16x128xf32>
    %28 = tpu.matmul %25, %27, %cst_16 {dimension_numbers = #tpu.dot_dimension_numbers<[1], [0], [0], [1], [0, 0, 1, 1], [], []>} : vector<16x128xbf16>, vector<128x128xbf16>, vector<16x128xf32> -> vector<16x128xf32>
    %29 = arith.addf %24, %28 : vector<16x128xf32>
    %cst_17 = arith.constant dense<0.000000e+00> : vector<128xf32>
    %30 = vector.multi_reduction <add>, %29, %cst_17 [0] : vector<16x128xf32> to vector<128xf32>
    %31 = vector.shape_cast %30 : vector<128xf32> to vector<1x128xf32>
    %32 = arith.mulf %29, %29 : vector<16x128xf32>
    %cst_18 = arith.constant dense<0.000000e+00> : vector<128xf32>
    %33 = vector.multi_reduction <add>, %32, %cst_18 [0] : vector<16x128xf32> to vector<128xf32>
    %34 = vector.shape_cast %33 : vector<128xf32> to vector<1x128xf32>
    %35 = tpu.concatenate %31, %34 in 0 : vector<1x128xf32>, vector<1x128xf32> -> vector<2x128xf32>
    %c0_19 = arith.constant 0 : index
    %c0_20 = arith.constant 0 : index
    %c0_21 = arith.constant 0 : index
    %c0_22 = arith.constant 0 : index
    %36 = vector.load %arg7[%c0_19, %c0_20, %c0_21, %c0_22] : memref<1x1x2x128xf32, #tpu.memory_space<vmem>>, vector<1x1x2x128xf32>
    %37 = vector.shape_cast %36 : vector<1x1x2x128xf32> to vector<2x128xf32>
    %38 = vector.shape_cast %35 : vector<2x128xf32> to vector<1x1x2x128xf32>
    tpu.vector_store %arg7[%c0_19, %c0_20, %c0_21, %c0_22], %38 {strides = array<i32>} : memref<1x1x2x128xf32, #tpu.memory_space<vmem>>, vector<1x1x2x128xf32>,
    %39 = arith.truncf %29 : vector<16x128xf32> to vector<16x128xbf16>
    %c0_23 = arith.constant 0 : index
    %c0_24 = arith.constant 0 : index
    %c0_25 = arith.constant 0 : index
    %40 = vector.load %arg6[%c0_23, %c0_24, %c0_25] : memref<1x16x128xbf16, #tpu.memory_space<vmem>>, vector<1x16x128xbf16>
    %41 = vector.shape_cast %40 : vector<1x16x128xbf16> to vector<16x128xbf16>
    %42 = vector.shape_cast %39 : vector<16x128xbf16> to vector<1x16x128xbf16>
    tpu.vector_store %arg6[%c0_23, %c0_24, %c0_25], %42 {strides = array<i32>} : memref<1x16x128xbf16, #tpu.memory_space<vmem>>, vector<1x16x128xbf16>,
    return
  }
  func.func @transform_0(%arg0: i32, %arg1: i32) -> (i32, i32, i32) {
    %c0_i32 = arith.constant 0 : i32
    %c0_i32_0 = arith.constant 0 : i32
    %c0_i32_1 = arith.constant 0 : i32
    return %arg0, %c0_i32, %c0_i32_0 : i32, i32, i32
  }
  func.func @transform_1(%arg0: i32, %arg1: i32) -> (i32, i32, i32) {
    %c0_i32 = arith.constant 0 : i32
    %c0_i32_0 = arith.constant 0 : i32
    %c0_i32_1 = arith.constant 0 : i32
    %c0_i32_2 = arith.constant 0 : i32
    return %c0_i32, %c0_i32_0, %c0_i32_1 : i32, i32, i32
  }
  func.func @transform_2(%arg0: i32, %arg1: i32) -> (i32, i32) {
    %c0_i32 = arith.constant 0 : i32
    %c0_i32_0 = arith.constant 0 : i32
    %c0_i32_1 = arith.constant 0 : i32
    return %c0_i32, %c0_i32_0 : i32, i32
  }
  func.func @transform_3(%arg0: i32, %arg1: i32) -> (i32, i32) {
    %c0_i32 = arith.constant 0 : i32
    %c0_i32_0 = arith.constant 0 : i32
    %c0_i32_1 = arith.constant 0 : i32
    return %c0_i32, %c0_i32_0 : i32, i32
  }
  func.func @transform_4(%arg0: i32, %arg1: i32) -> (i32, i32, i32) {
    %c0_i32 = arith.constant 0 : i32
    %c0_i32_0 = arith.constant 0 : i32
    return %arg0, %arg1, %c0_i32 : i32, i32, i32
  }
  func.func @transform_5(%arg0: i32, %arg1: i32) -> (i32, i32, i32, i32) {
    %c0_i32 = arith.constant 0 : i32
    %c0_i32_0 = arith.constant 0 : i32
    %c0_i32_1 = arith.constant 0 : i32
    return %arg0, %arg1, %c0_i32, %c0_i32_0 : i32, i32, i32, i32
  }
}

module attributes {stable_mosaic.version = 11 : i64} {
  func.func @_bn_relu_kernel(%arg0: i32, %arg1: i32, %arg2: memref<1x16x128xbf16, #tpu.memory_space<vmem>>, %arg3: memref<1x128xf32, #tpu.memory_space<vmem>>, %arg4: memref<1x128xf32, #tpu.memory_space<vmem>>, %arg5: memref<1x16x128xf32, #tpu.memory_space<vmem>>) attributes {dimension_semantics = [#tpu.dimension_semantics<parallel>, #tpu.dimension_semantics<parallel>], iteration_bounds = array<i64: 2, 1>, scalar_prefetch = 0 : i64, scratch_operands = 0 : i64, tpu.core_type = #tpu.core_type<tc>, window_params = [{transform_indices = @transform_0, window_bounds = array<i64: 1, 16, 128>}, {pipeline_mode = #tpu.pipeline_mode<synchronous>, transform_indices = @transform_1, window_bounds = array<i64: 1, 128>}, {pipeline_mode = #tpu.pipeline_mode<synchronous>, transform_indices = @transform_2, window_bounds = array<i64: 1, 128>}, {transform_indices = @transform_3, window_bounds = array<i64: 1, 16, 128>}]} {
    %c0 = arith.constant 0 : index
    %c0_0 = arith.constant 0 : index
    %c0_1 = arith.constant 0 : index
    %0 = vector.load %arg2[%c0, %c0_0, %c0_1] : memref<1x16x128xbf16, #tpu.memory_space<vmem>>, vector<1x16x128xbf16>
    %1 = vector.shape_cast %0 : vector<1x16x128xbf16> to vector<16x128xbf16>
    %2 = arith.extf %1 : vector<16x128xbf16> to vector<16x128xf32>
    %c0_2 = arith.constant 0 : index
    %c0_3 = arith.constant 0 : index
    %3 = vector.load %arg3[%c0_2, %c0_3] : memref<1x128xf32, #tpu.memory_space<vmem>>, vector<1x128xf32>
    %4 = vector.broadcast %3 : vector<1x128xf32> to vector<16x128xf32>
    %5 = arith.mulf %2, %4 : vector<16x128xf32>
    %c0_4 = arith.constant 0 : index
    %c0_5 = arith.constant 0 : index
    %6 = vector.load %arg4[%c0_4, %c0_5] : memref<1x128xf32, #tpu.memory_space<vmem>>, vector<1x128xf32>
    %7 = vector.broadcast %6 : vector<1x128xf32> to vector<16x128xf32>
    %8 = arith.addf %5, %7 : vector<16x128xf32>
    %cst = arith.constant 0.000000e+00 : f32
    %9 = vector.broadcast %cst : f32 to vector<16x128xf32>
    %10 = arith.maximumf %8, %9 : vector<16x128xf32>
    %c0_6 = arith.constant 0 : index
    %c0_7 = arith.constant 0 : index
    %c0_8 = arith.constant 0 : index
    %11 = vector.load %arg5[%c0_6, %c0_7, %c0_8] : memref<1x16x128xf32, #tpu.memory_space<vmem>>, vector<1x16x128xf32>
    %12 = vector.shape_cast %11 : vector<1x16x128xf32> to vector<16x128xf32>
    %13 = vector.shape_cast %10 : vector<16x128xf32> to vector<1x16x128xf32>
    tpu.vector_store %arg5[%c0_6, %c0_7, %c0_8], %13 {strides = array<i32>} : memref<1x16x128xf32, #tpu.memory_space<vmem>>, vector<1x16x128xf32>,
    return
  }
  func.func @transform_0(%arg0: i32, %arg1: i32) -> (i32, i32, i32) {
    %c0_i32 = arith.constant 0 : i32
    %c0_i32_0 = arith.constant 0 : i32
    return %arg0, %arg1, %c0_i32 : i32, i32, i32
  }
  func.func @transform_1(%arg0: i32, %arg1: i32) -> (i32, i32) {
    %c0_i32 = arith.constant 0 : i32
    %c0_i32_0 = arith.constant 0 : i32
    %c0_i32_1 = arith.constant 0 : i32
    return %c0_i32, %c0_i32_0 : i32, i32
  }
  func.func @transform_2(%arg0: i32, %arg1: i32) -> (i32, i32) {
    %c0_i32 = arith.constant 0 : i32
    %c0_i32_0 = arith.constant 0 : i32
    %c0_i32_1 = arith.constant 0 : i32
    return %c0_i32, %c0_i32_0 : i32, i32
  }
  func.func @transform_3(%arg0: i32, %arg1: i32) -> (i32, i32, i32) {
    %c0_i32 = arith.constant 0 : i32
    %c0_i32_0 = arith.constant 0 : i32
    return %arg0, %arg1, %c0_i32 : i32, i32, i32
  }
}

</mosaic_0001>

<llo_original>
// kernel: _lambda_.3
$region0: #{_lambda_.3}
  #allocation0 [shape = 'u32[]', space=smem, size = 0x4, offset = 0x4, fixed_abs, tag = 'smem constant byte address 0x4 - core index']
  #allocation1 [shape = 'u32[144,128]{1,0:T(1,128)}', space=vmem, size = 0x12000, scoped, tag = 'internal scratch']
  %s0 = inlined_call_operand.vmem [shape: bf16[2,16,64], index: 0, kind: input, shape index: {}]
  %s1 = inlined_call_operand.vmem [shape: bf16[3,64,128], index: 1, kind: input, shape index: {}]
  %s2 = inlined_call_operand.vmem [shape: bf16[2,16,128], index: 2, kind: output, shape index: {0}]
  %s3 = inlined_call_operand.vmem [shape: f32[2,1,2,128], index: 3, kind: output, shape index: {1}]
  %4 = xla_tuple %s2, %s3
  %s5 = sld [smem:[#allocation0]]
  $region49: #{_lambda_.3} parent=0
    _
  %s7 = ssub.s32 1, %s5
  %s8 = scalar_select 0, %s7, %s5
  loop: start=0, step=1, limit=4
  $region2: #{_lambda_.3} parent=0 // loop_pre_header
    _
  $region3: #{_lambda_.3} parent=0 // loop_header
    %s10 = sphi 0, %s14
    %p11 = scmp.ge.s32.totalorder %s10, 4
    %s17 = sphi 0, %s29
    %s18 = sphi 0, %s25
    %s19 = sphi 0, %s17
    %s20 = sphi 0, %s18
    %s21 = sphi 0, %s19
    %s22 = sphi 0, %s20
    %s32 = sphi 0, %s34
    %s35 = sphi 0, %s32
    %s36 = sphi 0, %s35
    %s52 = sphi 0, %s36
    %s56 = sphi 0, %s56
    %s58 = sphi 0, %s56
    %s59 = sphi 0, %s58
    %s73 = sphi 0, %s59
    %s81 = sphi 0, %s83
    %s84 = sphi 0, %s81
    %s85 = sphi 0, %s84
    %s101 = sphi 0, %s85
    %s109 = sphi 0, %s111
    %s112 = sphi 0, %s109
    %s113 = sphi 0, %s112
    %s129 = sphi 0, %s113
  $region4: #{_lambda_.3} parent=0 // loop_header_branch
    %13 = sbr.rel (%p11) target = $region8
  $region5: #{_lambda_.3} parent=0 // loop_body
    %s15 = ssub.s32 %s10, 1
    %s16 = ssub.s32 %s10, 2
    %s23 = sadd.s32 1, %s18
    %p24 = scmp.ge.s32.totalorder %s23, 1
    %s25 = scalar_select %p24, 0, %s23
    %s26 = sadd.s32 1, %s17
    %s27 = scalar_select %p24, %s26, %s17
    %p28 = scmp.ge.s32.totalorder %s27, 2
    %s29 = scalar_select %p28, 0, %s27
    %s30 = ssub.s32 %s17, %s29
    %p31 = scmp.eq.s32.totalorder %s30, 0
    %s33 = sadd.s32 %s32, 1
    %s34 = scalar_select %p31, %s32, %s33
    %p37 = pneg %p31
    %p38 = scmp.eq.s32.totalorder %s10, 1
    %p39 = por %p37, %p38
    %p40 = scmp.ne.s32.totalorder %s32, %s35
    %p41 = scmp.eq.s32.totalorder %s10, 0
    %p42 = por %p40, %p41
    %p43 = scmp.ne.s32.totalorder %s32, %s35
    %p44 = scmp.eq.s32.totalorder %s15, 1
    %p45 = por %p43, %p44
    %p46 = scmp.ne.s32.totalorder %s35, %s36
    %p47 = scmp.eq.s32.totalorder %s15, 0
    %p48 = por %p46, %p47
    %p49 = scmp.ne.s32.totalorder %s35, %s36
    %p50 = scmp.eq.s32.totalorder %s16, 1
    %p51 = por %p49, %p50
    %p53 = scmp.ne.s32.totalorder %s36, %s52
    %p54 = scmp.eq.s32.totalorder %s16, 0
    %p55 = por %p53, %p54
    %s57 = sadd.s32 %s56, 1
    %p60 = scmp.eq.s32.totalorder %s10, 1
    %p61 = scmp.ne.s32.totalorder %s56, %s58
    %p62 = scmp.eq.s32.totalorder %s10, 0
    %p63 = por %p61, %p62
    %p64 = scmp.ne.s32.totalorder %s56, %s58
    %p65 = scmp.eq.s32.totalorder %s15, 1
    %p66 = por %p64, %p65
    %p67 = scmp.ne.s32.totalorder %s58, %s59
    %p68 = scmp.eq.s32.totalorder %s15, 0
    %p69 = por %p67, %p68
    %p70 = scmp.ne.s32.totalorder %s58, %s59
    %p71 = scmp.eq.s32.totalorder %s16, 1
    %p72 = por %p70, %p71
    %p74 = scmp.ne.s32.totalorder %s59, %s73
    %p75 = scmp.eq.s32.totalorder %s16, 0
    %p76 = por %p74, %p75
    %s77 = ssub.s32 %s17, %s29
    %s78 = ssub.s32 %s18, %s25
    %s79 = sor.u32 %s77, %s78
    %p80 = scmp.eq.s32.totalorder %s79, 0
    %s82 = sadd.s32 %s81, 1
    %s83 = scalar_select %p80, %s81, %s82
    %p86 = pneg %p80
    %p87 = scmp.eq.s32.totalorder %s10, 1
    %p88 = por %p86, %p87
    %p89 = scmp.ne.s32.totalorder %s81, %s84
    %p90 = scmp.eq.s32.totalorder %s10, 0
    %p91 = por %p89, %p90
    %p92 = scmp.ne.s32.totalorder %s81, %s84
    %p93 = scmp.eq.s32.totalorder %s15, 1
    %p94 = por %p92, %p93
    %p95 = scmp.ne.s32.totalorder %s84, %s85
    %p96 = scmp.eq.s32.totalorder %s15, 0
    %p97 = por %p95, %p96
    %p98 = scmp.ne.s32.totalorder %s84, %s85
    %p99 = scmp.eq.s32.totalorder %s16, 1
    %p100 = por %p98, %p99
    %p102 = scmp.ne.s32.totalorder %s85, %s101
    %p103 = scmp.eq.s32.totalorder %s16, 0
    %p104 = por %p102, %p103
    %s105 = ssub.s32 %s17, %s29
    %s106 = ssub.s32 %s18, %s25
    %s107 = sor.u32 %s105, %s106
    %p108 = scmp.eq.s32.totalorder %s107, 0
    %s110 = sadd.s32 %s109, 1
    %s111 = scalar_select %p108, %s109, %s110
    %p114 = pneg %p108
    %p115 = scmp.eq.s32.totalorder %s10, 1
    %p116 = por %p114, %p115
    %p117 = scmp.ne.s32.totalorder %s109, %s112
    %p118 = scmp.eq.s32.totalorder %s10, 0
    %p119 = por %p117, %p118
    %p120 = scmp.ne.s32.totalorder %s109, %s112
    %p121 = scmp.eq.s32.totalorder %s15, 1
    %p122 = por %p120, %p121
    %p123 = scmp.ne.s32.totalorder %s112, %s113
    %p124 = scmp.eq.s32.totalorder %s15, 0
    %p125 = por %p123, %p124
    %p126 = scmp.ne.s32.totalorder %s112, %s113
    %p127 = scmp.eq.s32.totalorder %s16, 1
    %p128 = por %p126, %p127
    %p130 = scmp.ne.s32.totalorder %s113, %s129
    %p131 = scmp.eq.s32.totalorder %s16, 0
    %p132 = por %p130, %p131
    %p133 = scmp.le.s32.totalorder 1, %s10
    %p134 = scmp.lt.s32.totalorder %s10, 3
    %p135 = pnand %p133, %p134
    %p136 = pneg %p135
    // Predicated region
    $region9: #{_lambda_.3} parent=5 // pred_check
      _
    $region10: #{_lambda_.3} parent=5 // pred_check_branch
      %138 = sbr.rel (%p135) target = $region12
    $region11: #{_lambda_.3} parent=5 // pred_region
      %s139 = ssub.s32 %s10, 1
      // Predicated region
      $region13: #{_lambda_.3} parent=11 // pred_check
        %p140 = pneg %p69
      $region14: #{_lambda_.3} parent=11 // pred_check_branch
        %142 = sbr.rel (%p140) target = $region16
      $region15: #{_lambda_.3} parent=11 // pred_region
        _
      $region16: #{_lambda_.3} parent=11 // pred_fallthru
        _
    $region12: #{_lambda_.3} parent=5 // pred_fallthru
      _
    %p143 = scmp.lt.s32.totalorder %s10, 2
    // Predicated region
    $region17: #{_lambda_.3} parent=5 // pred_check
      %p144 = pneg %p143
    $region18: #{_lambda_.3} parent=5 // pred_check_branch
      %146 = sbr.rel (%p144) target = $region20
    $region19: #{_lambda_.3} parent=5 // pred_region
      // Predicated region
      $region21: #{_lambda_.3} parent=19 // pred_check
        %p147 = pneg %p42
      $region22: #{_lambda_.3} parent=19 // pred_check_branch
        %149 = sbr.rel (%p147) target = $region24
      $region23: #{_lambda_.3} parent=19 // pred_region
        %p150 = scmp.lt.s32.totalorder %s17, 1
        %s151 = scalar_select %p150, %s17, 1
        %s152 = smul.addr %s151, 2
        %s153 = smul.addr %s152, 4
        %s154 = scalar_lea.vmem %s0, %s153
      $region24: #{_lambda_.3} parent=19 // pred_fallthru
        _
    $region20: #{_lambda_.3} parent=5 // pred_fallthru
      _
    %p155 = scmp.le.s32.totalorder 1, %s10
    %p156 = scmp.lt.s32.totalorder %s10, 3
    %p157 = pnand %p155, %p156
    %p158 = pneg %p157
    // Predicated region
    $region25: #{_lambda_.3} parent=5 // pred_check
      _
    $region26: #{_lambda_.3} parent=5 // pred_check_branch
      %160 = sbr.rel (%p157) target = $region28
    $region27: #{_lambda_.3} parent=5 // pred_region
      %s161 = ssub.s32 %s10, 1
      %p162 = scmp.lt.s32.totalorder %s19, 1
      %s163 = scalar_select %p162, %s19, 1
      %s164 = smul.addr %s163, 2
      %s165 = smul.addr %s164, 4
      %s166 = scalar_lea.vmem %s0, %s165
      %p167 = pneg %p48
      %p168 = pneg %p45
      %p169 = pneg %p69
      %p170 = pneg %p66
      %p171 = pneg %p97
      %p172 = pneg %p94
      %s173 = smul.u32 2, %s20
      %p174 = scmp.lt.s32.totalorder %s19, 1
      %s175 = scalar_select %p174, %s19, 1
      %p176 = scmp.lt.s32.totalorder %s173, 1
      %s177 = scalar_select %p176, %s173, 1
      %s178 = smul.addr %s175, 2
      %s179 = sadd.s32 %s177, %s178
      %s180 = smul.addr %s179, 4
      %s181 = scalar_lea.vmem %s2, %s180
      %p182 = pneg %p125
      %p183 = pneg %p122
      %p184 = scmp.lt.s32.totalorder %s19, 1
      %s185 = scalar_select %p184, %s19, 1
      %p186 = scmp.lt.s32.totalorder %s20, 0
      %s187 = scalar_select %p186, %s20, 0
      %s188 = sadd.s32 %s187, %s185
      %s189 = smul.addr %s188, 2
      %s190 = scalar_lea.vmem %s3, %s189
      %p191 = scmp.lt.s32.totalorder %s19, 1
      %s192 = scalar_select %p191, %s19, 1
      %s193 = smul.addr %s192, 2
      %s194 = smul.addr %s193, 4
      %s195 = scalar_lea.vmem %s0, %s194
      %s196 = smul.u32 2, %s20
      %p197 = scmp.lt.s32.totalorder %s19, 1
      %s198 = scalar_select %p197, %s19, 1
      %p199 = scmp.lt.s32.totalorder %s196, 1
      %s200 = scalar_select %p199, %s196, 1
      %s201 = smul.addr %s198, 2
      %s202 = sadd.s32 %s200, %s201
      %s203 = smul.addr %s202, 4
      %s204 = scalar_lea.vmem %s2, %s203
      %s205 = smul.u32 2, %s20
      %p206 = scmp.lt.s32.totalorder %s19, 1
      %s207 = scalar_select %p206, %s19, 1
      %p208 = scmp.lt.s32.totalorder %s20, 0
      %s209 = scalar_select %p208, %s20, 0
      %s210 = sadd.s32 %s209, %s207
      %s211 = smul.addr %s210, 2
      %s212 = scalar_lea.vmem %s3, %s211
      %v214 = vld [vmem:[%s195] sm:$0xf]
      %v215 = vld [vmem:[%s195 + $0x4] sm:$0xf]
      %v216 = vunpack.c.l.bf16 %v214
      %v217 = vunpack.c.l.bf16 %v215
      %vm220 = vcmask 1040384
      %v221 = vrot.slane %v216, 7
      %v222 = vrot.slane %v217, 7
      %v223 = vsel %vm220, %v221, %v222
      %v226 = vsel %vm220, 0.0, %v221
      %vm227 = vcmask 1046528
      %v228 = vrot.slane %v216, 1
      %v229 = vrot.slane %v217, 1
      %v230 = vsel %vm227, %v228, %v229
      %v233 = vsel %vm227, %v229, 0.0
      %v234 = vpack.c.bf16 %v223, %v226
      %v235 = vld [vmem:[%s1] sm:$0xf]
      %v236 = vld [vmem:[%s1 + $0x4] sm:$0xf]
      %v237 = vld [vmem:[%s1 + $0x8] sm:$0xf]
      %v238 = vld [vmem:[%s1 + $0xc] sm:$0xf]
      %v239 = vld [vmem:[%s1 + $0x10] sm:$0xf]
      %v240 = vld [vmem:[%s1 + $0x14] sm:$0xf]
      %v241 = vld [vmem:[%s1 + $0x18] sm:$0xf]
      %v242 = vld [vmem:[%s1 + $0x1c] sm:$0xf]
      %s243 = scalar_lea.vmem %s1, 32
      %v244 = vld [vmem:[%s243] sm:$0xf]
      %v245 = vld [vmem:[%s243 + $0x4] sm:$0xf]
      %v246 = vld [vmem:[%s243 + $0x8] sm:$0xf]
      %v247 = vld [vmem:[%s243 + $0xc] sm:$0xf]
      %v248 = vld [vmem:[%s243 + $0x10] sm:$0xf]
      %v249 = vld [vmem:[%s243 + $0x14] sm:$0xf]
      %v250 = vld [vmem:[%s243 + $0x18] sm:$0xf]
      %v251 = vld [vmem:[%s243 + $0x1c] sm:$0xf]
      %v254 = vunpack.c.l.b16 %v214
      %v255 = vunpack.c.l.b16 %v215
      %v256 = vpack.c.b16 %v255, %v254
      %v265 = vunpack.c.l.b16 %v244
      %v266 = vunpack.c.l.b16 %v245
      %v267 = vunpack.c.l.b16 %v246
      %v268 = vunpack.c.l.b16 %v247
      %v269 = vunpack.c.l.b16 %v248
      %v270 = vunpack.c.l.b16 %v249
      %v271 = vunpack.c.l.b16 %v250
      %v272 = vunpack.c.l.b16 %v251
      %v273 = vpack.c.b16 %v266, %v265
      %v274 = vpack.c.b16 %v268, %v267
      %v275 = vpack.c.b16 %v270, %v269
      %v276 = vpack.c.b16 %v272, %v271
      %vm281 = vcmask 523264
      %v283 = vsel %vm281, %v256, 0
      %285 = vmatprep.subr.bf16.mxu0 0
      %286 = vmatpush1.bf16.msra.mxu0 %v273
      %287 = vmatprep.subr.bf16.mxu0 0
      %288 = vmatpush1.bf16.msra.mxu0 %v274
      %289 = vmatprep.subr.bf16.mxu0 0
      %290 = vmatpush1.bf16.msra.mxu0 %v275
      %291 = vmatprep.subr.bf16.mxu0 0
      %292 = vmatpush1.bf16.msra.mxu0 %v276
      %293 = vmatprep.subr.bf16.mxu0 0
      %294 = vmatpush1.bf16.msra.mxu0 0
      %295 = vmatprep.subr.bf16.mxu0 0
      %296 = vmatpush1.bf16.msra.mxu0 0
      %297 = vmatprep.subr.bf16.mxu0 0
      %298 = vmatpush1.bf16.msra.mxu0 0
      %299 = vmatprep.subr.bf16.mxu0 0
      %300 = vmatpush1.bf16.msra.mxu0 0
      %301 = vmatprep.subr.bf16.mxu0 0
      %302 = vmatpush1.bf16.msra.mxu0 0
      %303 = vmatprep.subr.bf16.mxu0 0
      %304 = vmatpush1.bf16.msra.mxu0 0
      %305 = vmatprep.subr.bf16.mxu0 0
      %306 = vmatpush1.bf16.msra.mxu0 0
      %307 = vmatprep.subr.bf16.mxu0 0
      %308 = vmatpush1.bf16.msra.mxu0 0
      %309 = vmatprep.subr.bf16.mxu0 0
      %310 = vmatpush1.bf16.msra.mxu0 0
      %311 = vmatprep.subr.bf16.mxu0 0
      %312 = vmatpush1.bf16.msra.mxu0 0
      %313 = vmatprep.subr.bf16.mxu0 0
      %314 = vmatpush1.bf16.msra.mxu0 0
      %315 = vmatprep.subr.bf16.mxu0 0
      %316 = vmatpush1.bf16.msra.mxu0 0
      %317 = vmatprep.mubr.bf16.mxu0 0
      %318 = vmatmul.mubr.bf16.gmra.mrb[0].mxu0 %v283
      %v319 = vpop.f32.mrb[0].mxu0
      %v320 = vadd.f32 0.0, %v319
      %v321 = vpop.f32.mrb[0].mxu0
      %v322 = vpop.f32.mrb[0].mxu0
      %v323 = vadd.f32 0.0, %v322
      %v324 = vpop.f32.mrb[0].mxu0
      %325 = vdwg.mxu0
      %v334 = vunpack.c.l.b16 %v235
      %v335 = vunpack.c.l.b16 %v236
      %v336 = vunpack.c.l.b16 %v237
      %v337 = vunpack.c.l.b16 %v238
      %v338 = vunpack.c.l.b16 %v239
      %v339 = vunpack.c.l.b16 %v240
      %v340 = vunpack.c.l.b16 %v241
      %v341 = vunpack.c.l.b16 %v242
      %v342 = vpack.c.b16 %v335, %v334
      %v343 = vpack.c.b16 %v337, %v336
      %v344 = vpack.c.b16 %v339, %v338
      %v345 = vpack.c.b16 %v341, %v340
      %v351 = vsel %vm281, %v234, 0
      %353 = vmatprep.subr.bf16.mxu0 0
      %354 = vmatpush1.bf16.msra.mxu0 %v342
      %355 = vmatprep.subr.bf16.mxu0 0
      %356 = vmatpush1.bf16.msra.mxu0 %v343
      %357 = vmatprep.subr.bf16.mxu0 0
      %358 = vmatpush1.bf16.msra.mxu0 %v344
      %359 = vmatprep.subr.bf16.mxu0 0
      %360 = vmatpush1.bf16.msra.mxu0 %v345
      %361 = vmatprep.subr.bf16.mxu0 0
      %362 = vmatpush1.bf16.msra.mxu0 0
      %363 = vmatprep.subr.bf16.mxu0 0
      %364 = vmatpush1.bf16.msra.mxu0 0
      %365 = vmatprep.subr.bf16.mxu0 0
      %366 = vmatpush1.bf16.msra.mxu0 0
      %367 = vmatprep.subr.bf16.mxu0 0
      %368 = vmatpush1.bf16.msra.mxu0 0
      %369 = vmatprep.subr.bf16.mxu0 0
      %370 = vmatpush1.bf16.msra.mxu0 0
      %371 = vmatprep.subr.bf16.mxu0 0
      %372 = vmatpush1.bf16.msra.mxu0 0
      %373 = vmatprep.subr.bf16.mxu0 0
      %374 = vmatpush1.bf16.msra.mxu0 0
      %375 = vmatprep.subr.bf16.mxu0 0
      %376 = vmatpush1.bf16.msra.mxu0 0
      %377 = vmatprep.subr.bf16.mxu0 0
      %378 = vmatpush1.bf16.msra.mxu0 0
      %379 = vmatprep.subr.bf16.mxu0 0
      %380 = vmatpush1.bf16.msra.mxu0 0
      %381 = vmatprep.subr.bf16.mxu0 0
      %382 = vmatpush1.bf16.msra.mxu0 0
      %383 = vmatprep.subr.bf16.mxu0 0
      %384 = vmatpush1.bf16.msra.mxu0 0
      %385 = vmatprep.mubr.bf16.mxu0 0
      %386 = vmatmul.mubr.bf16.gmra.mrb[0].mxu0 %v351
      %v387 = vpop.f32.mrb[0].mxu0
      %v388 = vadd.f32 %v320, %v387
      %v389 = vpop.f32.mrb[0].mxu0
      %v390 = vpop.f32.mrb[0].mxu0
      %v391 = vadd.f32 %v323, %v390
      %v392 = vpop.f32.mrb[0].mxu0
      %393 = vdwg.mxu0
      %v394 = vpack.c.bf16 %v233, %v230
      %s395 = scalar_lea.vmem %s1, 64
      %v396 = vld [vmem:[%s395] sm:$0xf]
      %v397 = vld [vmem:[%s395 + $0x4] sm:$0xf]
      %v398 = vld [vmem:[%s395 + $0x8] sm:$0xf]
      %v399 = vld [vmem:[%s395 + $0xc] sm:$0xf]
      %v400 = vld [vmem:[%s395 + $0x10] sm:$0xf]
      %v401 = vld [vmem:[%s395 + $0x14] sm:$0xf]
      %v402 = vld [vmem:[%s395 + $0x18] sm:$0xf]
      %v403 = vld [vmem:[%s395 + $0x1c] sm:$0xf]
      %v412 = vunpack.c.l.b16 %v396
      %v413 = vunpack.c.l.b16 %v397
      %v414 = vunpack.c.l.b16 %v398
      %v415 = vunpack.c.l.b16 %v399
      %v416 = vunpack.c.l.b16 %v400
      %v417 = vunpack.c.l.b16 %v401
      %v418 = vunpack.c.l.b16 %v402
      %v419 = vunpack.c.l.b16 %v403
      %v420 = vpack.c.b16 %v413, %v412
      %v421 = vpack.c.b16 %v415, %v414
      %v422 = vpack.c.b16 %v417, %v416
      %v423 = vpack.c.b16 %v419, %v418
      %v429 = vsel %vm281, %v394, 0
      %431 = vmatprep.subr.bf16.mxu0 0
      %432 = vmatpush1.bf16.msra.mxu0 %v420
      %433 = vmatprep.subr.bf16.mxu0 0
      %434 = vmatpush1.bf16.msra.mxu0 %v421
      %435 = vmatprep.subr.bf16.mxu0 0
      %436 = vmatpush1.bf16.msra.mxu0 %v422
      %437 = vmatprep.subr.bf16.mxu0 0
      %438 = vmatpush1.bf16.msra.mxu0 %v423
      %439 = vmatprep.subr.bf16.mxu0 0
      %440 = vmatpush1.bf16.msra.mxu0 0
      %441 = vmatprep.subr.bf16.mxu0 0
      %442 = vmatpush1.bf16.msra.mxu0 0
      %443 = vmatprep.subr.bf16.mxu0 0
      %444 = vmatpush1.bf16.msra.mxu0 0
      %445 = vmatprep.subr.bf16.mxu0 0
      %446 = vmatpush1.bf16.msra.mxu0 0
      %447 = vmatprep.subr.bf16.mxu0 0
      %448 = vmatpush1.bf16.msra.mxu0 0
      %449 = vmatprep.subr.bf16.mxu0 0
      %450 = vmatpush1.bf16.msra.mxu0 0
      %451 = vmatprep.subr.bf16.mxu0 0
      %452 = vmatpush1.bf16.msra.mxu0 0
      %453 = vmatprep.subr.bf16.mxu0 0
      %454 = vmatpush1.bf16.msra.mxu0 0
      %455 = vmatprep.subr.bf16.mxu0 0
      %456 = vmatpush1.bf16.msra.mxu0 0
      %457 = vmatprep.subr.bf16.mxu0 0
      %458 = vmatpush1.bf16.msra.mxu0 0
      %459 = vmatprep.subr.bf16.mxu0 0
      %460 = vmatpush1.bf16.msra.mxu0 0
      %461 = vmatprep.subr.bf16.mxu0 0
      %462 = vmatpush1.bf16.msra.mxu0 0
      %463 = vmatprep.mubr.bf16.mxu0 0
      %464 = vmatmul.mubr.bf16.gmra.mrb[0].mxu0 %v429
      %v465 = vpop.f32.mrb[0].mxu0
      %v466 = vadd.f32 0.0, %v465
      %v467 = vpop.f32.mrb[0].mxu0
      %v468 = vpop.f32.mrb[0].mxu0
      %v469 = vadd.f32 0.0, %v468
      %v470 = vpop.f32.mrb[0].mxu0
      %471 = vdwg.mxu0
      %v472 = vadd.f32 %v388, %v466
      %v473 = vadd.f32 %v391, %v469
      %v474 = vadd.f32 %v472, %v473
      %v475 = vrot.slane %v474, 4
      %v476 = vadd.f32 %v474, %v475
      %v477 = vrot.slane %v476, 2
      %v478 = vadd.f32 %v476, %v477
      %v479 = vrot.slane %v478, 1
      %v480 = vadd.f32 %v478, %v479
      %v481 = vmul.f32 %v472, %v472
      %v482 = vmul.f32 %v473, %v473
      %v483 = vadd.f32 %v481, %v482
      %v484 = vrot.slane %v483, 4
      %v485 = vadd.f32 %v483, %v484
      %v486 = vrot.slane %v485, 2
      %v487 = vadd.f32 %v485, %v486
      %v488 = vrot.slane %v487, 1
      %v489 = vadd.f32 %v487, %v488
      %v490 = vsel %vm220, %v480, %v489
      %491 = vst [vmem:[%s212] sm:$0x3] %v490
      %v492 = vpack.c.bf16 %v473, %v472
      %v494 = vunpack.c.l.b16 %v492
      %v495 = vunpack.c.h.b16 %v492
      %v496 = vpack.c.b16 %v494, %v494
      %v497 = vpack.c.b16 %v495, %v495
      %500 = vst [vmem:[%s204] sm:$0xf] %v496
      %501 = vst [vmem:[%s204 + $0x4] sm:$0xf] %v497
      %s502 = smul.u32 2, %s20
      %p503 = scmp.lt.s32.totalorder %s19, 1
      %s504 = scalar_select %p503, %s19, 1
      %p505 = scmp.lt.s32.totalorder %s502, 1
      %s506 = scalar_select %p505, %s502, 1
      %s507 = smul.addr %s504, 2
      %s508 = sadd.s32 %s506, %s507
      %s509 = smul.addr %s508, 4
      %s510 = scalar_lea.vmem %s2, %s509
      %p511 = scmp.lt.s32.totalorder %s19, 1
      %s512 = scalar_select %p511, %s19, 1
      %p513 = scmp.lt.s32.totalorder %s20, 0
      %s514 = scalar_select %p513, %s20, 0
      %s515 = sadd.s32 %s514, %s512
      %s516 = smul.addr %s515, 2
      %s517 = scalar_lea.vmem %s3, %s516
      // Predicated region
      $region29: #{_lambda_.3} parent=27 // pred_check
        %p518 = pneg %p94
      $region30: #{_lambda_.3} parent=27 // pred_check_branch
        %520 = sbr.rel (%p518) target = $region32
      $region31: #{_lambda_.3} parent=27 // pred_region
        %s521 = smul.u32 2, %s20
      $region32: #{_lambda_.3} parent=27 // pred_fallthru
        _
      // Predicated region
      $region33: #{_lambda_.3} parent=27 // pred_check
        %p522 = pneg %p122
      $region34: #{_lambda_.3} parent=27 // pred_check_branch
        %524 = sbr.rel (%p522) target = $region36
      $region35: #{_lambda_.3} parent=27 // pred_region
        _
      $region36: #{_lambda_.3} parent=27 // pred_fallthru
        _
    $region28: #{_lambda_.3} parent=5 // pred_fallthru
      _
    %p525 = scmp.le.s32.totalorder 2, %s10
    // Predicated region
    $region37: #{_lambda_.3} parent=5 // pred_check
      %p526 = pneg %p525
    $region38: #{_lambda_.3} parent=5 // pred_check_branch
      %528 = sbr.rel (%p526) target = $region40
    $region39: #{_lambda_.3} parent=5 // pred_region
      %s529 = ssub.s32 %s10, 2
      // Predicated region
      $region41: #{_lambda_.3} parent=39 // pred_check
        %p530 = pneg %p100
      $region42: #{_lambda_.3} parent=39 // pred_check_branch
        %532 = sbr.rel (%p530) target = $region44
      $region43: #{_lambda_.3} parent=39 // pred_region
        %s533 = smul.u32 2, %s22
        %p534 = scmp.lt.s32.totalorder %s21, 1
        %s535 = scalar_select %p534, %s21, 1
        %p536 = scmp.lt.s32.totalorder %s533, 1
        %s537 = scalar_select %p536, %s533, 1
        %s538 = smul.addr %s535, 2
        %s539 = sadd.s32 %s537, %s538
        %s540 = smul.addr %s539, 4
        %s541 = scalar_lea.vmem %s2, %s540
      $region44: #{_lambda_.3} parent=39 // pred_fallthru
        _
      // Predicated region
      $region45: #{_lambda_.3} parent=39 // pred_check
        %p542 = pneg %p128
      $region46: #{_lambda_.3} parent=39 // pred_check_branch
        %544 = sbr.rel (%p542) target = $region48
      $region47: #{_lambda_.3} parent=39 // pred_region
        %p545 = scmp.lt.s32.totalorder %s21, 1
        %s546 = scalar_select %p545, %s21, 1
        %p547 = scmp.lt.s32.totalorder %s22, 0
        %s548 = scalar_select %p547, %s22, 0
        %s549 = sadd.s32 %s548, %s546
        %s550 = smul.addr %s549, 2
        %s551 = scalar_lea.vmem %s3, %s550
      $region48: #{_lambda_.3} parent=39 // pred_fallthru
        _
    $region40: #{_lambda_.3} parent=5 // pred_fallthru
      _
  $region6: #{_lambda_.3} parent=0 // loop_footer
    %s14 = sadd.s32 1, %s10
  $region7: #{_lambda_.3} parent=0 // loop_footer_branch
    %9 = sbr.rel target = $region3
  $region8: #{_lambda_.3} parent=0 // loop_exit
    _

// kernel: tile.23
$region0: #{tile.23}
  #allocation0 [shape = 's32[1]{0}', space=sflag, size = 0x4, scoped, tag = 'scoped memory for tile.23']
  %s0 = inlined_call_operand.vmem [shape: f32[8], index: 0, kind: input, shape index: {}]
  %s1 = inlined_call_operand.vmem [shape: f32[16,8], index: 1, kind: output, shape index: {}]
  // Predicated region
  $region2: #{tile.23} parent=0 // pred_check
    _
  $region3: #{tile.23} parent=0 // pred_check_branch
    %3 = sbr.rel (0) target = $region5
  $region4: #{tile.23} parent=0 // pred_region
    _
  $region5: #{tile.23} parent=0 // pred_fallthru
    _
  %v4 = vld [vmem:[%s0] ss:$0 sm:$0xff]
  %5 = vst [vmem:[%s1] sm:$0xff] %v4
  %s6 = scalar_lea.vmem %s1, 8
  %7 = vst [vmem:[%s6] sm:$0xff] %v4

// kernel: tile.24
$region0: #{tile.24}
  %s0 = inlined_call_operand.vmem [shape: f32[16,8], index: 0, kind: input, shape index: {}]
  %s1 = inlined_call_operand.vmem [shape: f32[1,128], index: 1, kind: output, shape index: {}]
  $region1: #{tile.24} parent=0
    #allocation0 [shape = 'u8[4096]{0}', space=vmem, size = 0x1000, scoped, tag = 'scoped mem for output reshape']
    %v2 = vld [vmem:[%s0] sm:$0x1]
    %vm3 = vcmask 64512
    %4 = vst.msk [vmem:[#allocation0] sm:$0x1] %vm3, %v2
    %s5 = scalar_lea.vmem %s0, 15
    %v6 = vld [vmem:[%s5] sm:$0x1]
    %7 = vrot.lane.b32.xlu0 %v6, 120
    %v8 = vpop.permute.xlu0 %7
    %vm9 = vcmask 1048512
    %10 = vst.msk [vmem:[#allocation0] sm:$0x1] %vm9, %v8
    %s11 = scalar_lea.vmem %s0, 14
    %v12 = vld [vmem:[%s11] sm:$0x1]
    %13 = vrot.lane.b32.xlu0 %v12, 112
    %v14 = vpop.permute.xlu0 %13
    %vm15 = vcmask 982912
    %16 = vst.msk [vmem:[#allocation0] sm:$0x1] %vm15, %v14
    %s17 = scalar_lea.vmem %s0, 13
    %v18 = vld [vmem:[%s17] sm:$0x1]
    %19 = vrot.lane.b32.xlu0 %v18, 104
    %v20 = vpop.permute.xlu0 %19
    %vm21 = vcmask 917312
    %22 = vst.msk [vmem:[#allocation0] sm:$0x1] %vm21, %v20
    %s23 = scalar_lea.vmem %s0, 12
    %v24 = vld [vmem:[%s23] sm:$0x1]
    %25 = vrot.lane.b32.xlu0 %v24, 96
    %v26 = vpop.permute.xlu0 %25
    %vm27 = vcmask 851712
    %28 = vst.msk [vmem:[#allocation0] sm:$0x1] %vm27, %v26
    %s29 = scalar_lea.vmem %s0, 11
    %v30 = vld [vmem:[%s29] sm:$0x1]
    %31 = vrot.lane.b32.xlu0 %v30, 88
    %v32 = vpop.permute.xlu0 %31
    %vm33 = vcmask 786112
    %34 = vst.msk [vmem:[#allocation0] sm:$0x1] %vm33, %v32
    %s35 = scalar_lea.vmem %s0, 10
    %v36 = vld [vmem:[%s35] sm:$0x1]
    %37 = vrot.lane.b32.xlu0 %v36, 80
    %v38 = vpop.permute.xlu0 %37
    %vm39 = vcmask 720512
    %40 = vst.msk [vmem:[#allocation0] sm:$0x1] %vm39, %v38
    %s41 = scalar_lea.vmem %s0, 9
    %v42 = vld [vmem:[%s41] sm:$0x1]
    %43 = vrot.lane.b32.xlu0 %v42, 72
    %v44 = vpop.permute.xlu0 %43
    %vm45 = vcmask 654912
    %46 = vst.msk [vmem:[#allocation0] sm:$0x1] %vm45, %v44
    %s47 = scalar_lea.vmem %s0, 8
    %v48 = vld [vmem:[%s47] sm:$0x1]
    %49 = vrot.lane.b32.xlu0 %v48, 64
    %v50 = vpop.permute.xlu0 %49
    %vm51 = vcmask 589312
    %52 = vst.msk [vmem:[#allocation0] sm:$0x1] %vm51, %v50
    %s53 = scalar_lea.vmem %s0, 7
    %v54 = vld [vmem:[%s53] sm:$0x1]
    %55 = vrot.lane.b32.xlu0 %v54, 56
    %v56 = vpop.permute.xlu0 %55
    %vm57 = vcmask 523712
    %58 = vst.msk [vmem:[#allocation0] sm:$0x1] %vm57, %v56
    %s59 = scalar_lea.vmem %s0, 6
    %v60 = vld [vmem:[%s59] sm:$0x1]
    %61 = vrot.lane.b32.xlu0 %v60, 48
    %v62 = vpop.permute.xlu0 %61
    %vm63 = vcmask 458112
    %64 = vst.msk [vmem:[#allocation0] sm:$0x1] %vm63, %v62
    %s65 = scalar_lea.vmem %s0, 5
    %v66 = vld [vmem:[%s65] sm:$0x1]
    %67 = vrot.lane.b32.xlu0 %v66, 40
    %v68 = vpop.permute.xlu0 %67
    %vm69 = vcmask 392512
    %70 = vst.msk [vmem:[#allocation0] sm:$0x1] %vm69, %v68
    %s71 = scalar_lea.vmem %s0, 4
    %v72 = vld [vmem:[%s71] sm:$0x1]
    %73 = vrot.lane.b32.xlu0 %v72, 32
    %v74 = vpop.permute.xlu0 %73
    %vm75 = vcmask 326912
    %76 = vst.msk [vmem:[#allocation0] sm:$0x1] %vm75, %v74
    %s77 = scalar_lea.vmem %s0, 3
    %v78 = vld [vmem:[%s77] sm:$0x1]
    %79 = vrot.lane.b32.xlu0 %v78, 24
    %v80 = vpop.permute.xlu0 %79
    %vm81 = vcmask 261312
    %82 = vst.msk [vmem:[#allocation0] sm:$0x1] %vm81, %v80
    %s83 = scalar_lea.vmem %s0, 2
    %v84 = vld [vmem:[%s83] sm:$0x1]
    %85 = vrot.lane.b32.xlu0 %v84, 16
    %v86 = vpop.permute.xlu0 %85
    %vm87 = vcmask 195712
    %88 = vst.msk [vmem:[#allocation0] sm:$0x1] %vm87, %v86
    %s89 = scalar_lea.vmem %s0, 1
    %v90 = vld [vmem:[%s89] sm:$0x1]
    %91 = vrot.lane.b32.xlu0 %v90, 8
    %v92 = vpop.permute.xlu0 %91
    %vm93 = vcmask 130112
    %94 = vst.msk [vmem:[#allocation0] sm:$0x1] %vm93, %v92
    %s96 = sshllo.u32 0, 1
    %v98 = vld [vmem:[#allocation0] sm:%s96]
    %s99 = sshllo.u32 0, 1
    %100 = vst [vmem:[%s1] sm:%s99] %v98

// kernel: _lambda_.4
$region0: #{_lambda_.4}
  #allocation0 [shape = 'u32[]', space=smem, size = 0x4, offset = 0x4, fixed_abs, tag = 'smem constant byte address 0x4 - core index']
  #allocation1 [shape = 'u32[144,128]{1,0:T(1,128)}', space=vmem, size = 0x12000, scoped, tag = 'internal scratch']
  %s0 = inlined_call_operand.vmem [shape: bf16[2,16,128], index: 0, kind: input, shape index: {}]
  %s1 = inlined_call_operand.vmem [shape: bf16[3,128,128], index: 1, kind: input, shape index: {}]
  %s2 = inlined_call_operand.vmem [shape: f32[1,128], index: 2, kind: input, shape index: {}]
  %s3 = inlined_call_operand.vmem [shape: f32[1,128], index: 3, kind: input, shape index: {}]
  %s4 = inlined_call_operand.vmem [shape: bf16[2,16,128], index: 4, kind: output, shape index: {0}]
  %s5 = inlined_call_operand.vmem [shape: f32[2,1,2,128], index: 5, kind: output, shape index: {1}]
  %6 = xla_tuple %s4, %s5
  %s7 = sld [smem:[#allocation0]]
  $region57: #{_lambda_.4} parent=0
    _
  %s9 = ssub.s32 1, %s7
  %s10 = scalar_select 0, %s9, %s7
  loop: start=0, step=1, limit=4
  $region2: #{_lambda_.4} parent=0 // loop_pre_header
    _
  $region3: #{_lambda_.4} parent=0 // loop_header
    %s12 = sphi 0, %s16
    %p13 = scmp.ge.s32.totalorder %s12, 4
    %s19 = sphi 0, %s31
    %s20 = sphi 0, %s27
    %s21 = sphi 0, %s19
    %s22 = sphi 0, %s20
    %s23 = sphi 0, %s21
    %s24 = sphi 0, %s22
    %s34 = sphi 0, %s36
    %s37 = sphi 0, %s34
    %s38 = sphi 0, %s37
    %s54 = sphi 0, %s38
    %s58 = sphi 0, %s58
    %s60 = sphi 0, %s58
    %s61 = sphi 0, %s60
    %s75 = sphi 0, %s61
    %s79 = sphi 0, %s79
    %s81 = sphi 0, %s79
    %s82 = sphi 0, %s81
    %s96 = sphi 0, %s82
    %s100 = sphi 0, %s100
    %s102 = sphi 0, %s100
    %s103 = sphi 0, %s102
    %s117 = sphi 0, %s103
    %s125 = sphi 0, %s127
    %s128 = sphi 0, %s125
    %s129 = sphi 0, %s128
    %s145 = sphi 0, %s129
    %s153 = sphi 0, %s155
    %s156 = sphi 0, %s153
    %s157 = sphi 0, %s156
    %s173 = sphi 0, %s157
  $region4: #{_lambda_.4} parent=0 // loop_header_branch
    %15 = sbr.rel (%p13) target = $region8
  $region5: #{_lambda_.4} parent=0 // loop_body
    %s17 = ssub.s32 %s12, 1
    %s18 = ssub.s32 %s12, 2
    %s25 = sadd.s32 1, %s20
    %p26 = scmp.ge.s32.totalorder %s25, 1
    %s27 = scalar_select %p26, 0, %s25
    %s28 = sadd.s32 1, %s19
    %s29 = scalar_select %p26, %s28, %s19
    %p30 = scmp.ge.s32.totalorder %s29, 2
    %s31 = scalar_select %p30, 0, %s29
    %s32 = ssub.s32 %s19, %s31
    %p33 = scmp.eq.s32.totalorder %s32, 0
    %s35 = sadd.s32 %s34, 1
    %s36 = scalar_select %p33, %s34, %s35
    %p39 = pneg %p33
    %p40 = scmp.eq.s32.totalorder %s12, 1
    %p41 = por %p39, %p40
    %p42 = scmp.ne.s32.totalorder %s34, %s37
    %p43 = scmp.eq.s32.totalorder %s12, 0
    %p44 = por %p42, %p43
    %p45 = scmp.ne.s32.totalorder %s34, %s37
    %p46 = scmp.eq.s32.totalorder %s17, 1
    %p47 = por %p45, %p46
    %p48 = scmp.ne.s32.totalorder %s37, %s38
    %p49 = scmp.eq.s32.totalorder %s17, 0
    %p50 = por %p48, %p49
    %p51 = scmp.ne.s32.totalorder %s37, %s38
    %p52 = scmp.eq.s32.totalorder %s18, 1
    %p53 = por %p51, %p52
    %p55 = scmp.ne.s32.totalorder %s38, %s54
    %p56 = scmp.eq.s32.totalorder %s18, 0
    %p57 = por %p55, %p56
    %s59 = sadd.s32 %s58, 1
    %p62 = scmp.eq.s32.totalorder %s12, 1
    %p63 = scmp.ne.s32.totalorder %s58, %s60
    %p64 = scmp.eq.s32.totalorder %s12, 0
    %p65 = por %p63, %p64
    %p66 = scmp.ne.s32.totalorder %s58, %s60
    %p67 = scmp.eq.s32.totalorder %s17, 1
    %p68 = por %p66, %p67
    %p69 = scmp.ne.s32.totalorder %s60, %s61
    %p70 = scmp.eq.s32.totalorder %s17, 0
    %p71 = por %p69, %p70
    %p72 = scmp.ne.s32.totalorder %s60, %s61
    %p73 = scmp.eq.s32.totalorder %s18, 1
    %p74 = por %p72, %p73
    %p76 = scmp.ne.s32.totalorder %s61, %s75
    %p77 = scmp.eq.s32.totalorder %s18, 0
    %p78 = por %p76, %p77
    %s80 = sadd.s32 %s79, 1
    %p83 = scmp.eq.s32.totalorder %s12, 1
    %p84 = scmp.ne.s32.totalorder %s79, %s81
    %p85 = scmp.eq.s32.totalorder %s12, 0
    %p86 = por %p84, %p85
    %p87 = scmp.ne.s32.totalorder %s79, %s81
    %p88 = scmp.eq.s32.totalorder %s17, 1
    %p89 = por %p87, %p88
    %p90 = scmp.ne.s32.totalorder %s81, %s82
    %p91 = scmp.eq.s32.totalorder %s17, 0
    %p92 = por %p90, %p91
    %p93 = scmp.ne.s32.totalorder %s81, %s82
    %p94 = scmp.eq.s32.totalorder %s18, 1
    %p95 = por %p93, %p94
    %p97 = scmp.ne.s32.totalorder %s82, %s96
    %p98 = scmp.eq.s32.totalorder %s18, 0
    %p99 = por %p97, %p98
    %s101 = sadd.s32 %s100, 1
    %p104 = scmp.eq.s32.totalorder %s12, 1
    %p105 = scmp.ne.s32.totalorder %s100, %s102
    %p106 = scmp.eq.s32.totalorder %s12, 0
    %p107 = por %p105, %p106
    %p108 = scmp.ne.s32.totalorder %s100, %s102
    %p109 = scmp.eq.s32.totalorder %s17, 1
    %p110 = por %p108, %p109
    %p111 = scmp.ne.s32.totalorder %s102, %s103
    %p112 = scmp.eq.s32.totalorder %s17, 0
    %p113 = por %p111, %p112
    %p114 = scmp.ne.s32.totalorder %s102, %s103
    %p115 = scmp.eq.s32.totalorder %s18, 1
    %p116 = por %p114, %p115
    %p118 = scmp.ne.s32.totalorder %s103, %s117
    %p119 = scmp.eq.s32.totalorder %s18, 0
    %p120 = por %p118, %p119
    %s121 = ssub.s32 %s19, %s31
    %s122 = ssub.s32 %s20, %s27
    %s123 = sor.u32 %s121, %s122
    %p124 = scmp.eq.s32.totalorder %s123, 0
    %s126 = sadd.s32 %s125, 1
    %s127 = scalar_select %p124, %s125, %s126
    %p130 = pneg %p124
    %p131 = scmp.eq.s32.totalorder %s12, 1
    %p132 = por %p130, %p131
    %p133 = scmp.ne.s32.totalorder %s125, %s128
    %p134 = scmp.eq.s32.totalorder %s12, 0
    %p135 = por %p133, %p134
    %p136 = scmp.ne.s32.totalorder %s125, %s128
    %p137 = scmp.eq.s32.totalorder %s17, 1
    %p138 = por %p136, %p137
    %p139 = scmp.ne.s32.totalorder %s128, %s129
    %p140 = scmp.eq.s32.totalorder %s17, 0
    %p141 = por %p139, %p140
    %p142 = scmp.ne.s32.totalorder %s128, %s129
    %p143 = scmp.eq.s32.totalorder %s18, 1
    %p144 = por %p142, %p143
    %p146 = scmp.ne.s32.totalorder %s129, %s145
    %p147 = scmp.eq.s32.totalorder %s18, 0
    %p148 = por %p146, %p147
    %s149 = ssub.s32 %s19, %s31
    %s150 = ssub.s32 %s20, %s27
    %s151 = sor.u32 %s149, %s150
    %p152 = scmp.eq.s32.totalorder %s151, 0
    %s154 = sadd.s32 %s153, 1
    %s155 = scalar_select %p152, %s153, %s154
    %p158 = pneg %p152
    %p159 = scmp.eq.s32.totalorder %s12, 1
    %p160 = por %p158, %p159
    %p161 = scmp.ne.s32.totalorder %s153, %s156
    %p162 = scmp.eq.s32.totalorder %s12, 0
    %p163 = por %p161, %p162
    %p164 = scmp.ne.s32.totalorder %s153, %s156
    %p165 = scmp.eq.s32.totalorder %s17, 1
    %p166 = por %p164, %p165
    %p167 = scmp.ne.s32.totalorder %s156, %s157
    %p168 = scmp.eq.s32.totalorder %s17, 0
    %p169 = por %p167, %p168
    %p170 = scmp.ne.s32.totalorder %s156, %s157
    %p171 = scmp.eq.s32.totalorder %s18, 1
    %p172 = por %p170, %p171
    %p174 = scmp.ne.s32.totalorder %s157, %s173
    %p175 = scmp.eq.s32.totalorder %s18, 0
    %p176 = por %p174, %p175
    %p177 = scmp.le.s32.totalorder 1, %s12
    %p178 = scmp.lt.s32.totalorder %s12, 3
    %p179 = pnand %p177, %p178
    %p180 = pneg %p179
    // Predicated region
    $region9: #{_lambda_.4} parent=5 // pred_check
      _
    $region10: #{_lambda_.4} parent=5 // pred_check_branch
      %182 = sbr.rel (%p179) target = $region12
    $region11: #{_lambda_.4} parent=5 // pred_region
      %s183 = ssub.s32 %s12, 1
      // Predicated region
      $region13: #{_lambda_.4} parent=11 // pred_check
        %p184 = pneg %p71
      $region14: #{_lambda_.4} parent=11 // pred_check_branch
        %186 = sbr.rel (%p184) target = $region16
      $region15: #{_lambda_.4} parent=11 // pred_region
        _
      $region16: #{_lambda_.4} parent=11 // pred_fallthru
        _
      // Predicated region
      $region17: #{_lambda_.4} parent=11 // pred_check
        %p187 = pneg %p92
      $region18: #{_lambda_.4} parent=11 // pred_check_branch
        %189 = sbr.rel (%p187) target = $region20
      $region19: #{_lambda_.4} parent=11 // pred_region
        _
      $region20: #{_lambda_.4} parent=11 // pred_fallthru
        _
      // Predicated region
      $region21: #{_lambda_.4} parent=11 // pred_check
        %p190 = pneg %p113
      $region22: #{_lambda_.4} parent=11 // pred_check_branch
        %192 = sbr.rel (%p190) target = $region24
      $region23: #{_lambda_.4} parent=11 // pred_region
        _
      $region24: #{_lambda_.4} parent=11 // pred_fallthru
        _
    $region12: #{_lambda_.4} parent=5 // pred_fallthru
      _
    %p193 = scmp.lt.s32.totalorder %s12, 2
    // Predicated region
    $region25: #{_lambda_.4} parent=5 // pred_check
      %p194 = pneg %p193
    $region26: #{_lambda_.4} parent=5 // pred_check_branch
      %196 = sbr.rel (%p194) target = $region28
    $region27: #{_lambda_.4} parent=5 // pred_region
      // Predicated region
      $region29: #{_lambda_.4} parent=27 // pred_check
        %p197 = pneg %p44
      $region30: #{_lambda_.4} parent=27 // pred_check_branch
        %199 = sbr.rel (%p197) target = $region32
      $region31: #{_lambda_.4} parent=27 // pred_region
        %p200 = scmp.lt.s32.totalorder %s19, 1
        %s201 = scalar_select %p200, %s19, 1
        %s202 = smul.addr %s201, 2
        %s203 = smul.addr %s202, 4
        %s204 = scalar_lea.vmem %s0, %s203
      $region32: #{_lambda_.4} parent=27 // pred_fallthru
        _
    $region28: #{_lambda_.4} parent=5 // pred_fallthru
      _
    %p205 = scmp.le.s32.totalorder 1, %s12
    %p206 = scmp.lt.s32.totalorder %s12, 3
    %p207 = pnand %p205, %p206
    %p208 = pneg %p207
    // Predicated region
    $region33: #{_lambda_.4} parent=5 // pred_check
      _
    $region34: #{_lambda_.4} parent=5 // pred_check_branch
      %210 = sbr.rel (%p207) target = $region36
    $region35: #{_lambda_.4} parent=5 // pred_region
      %s211 = ssub.s32 %s12, 1
      %p212 = scmp.lt.s32.totalorder %s21, 1
      %s213 = scalar_select %p212, %s21, 1
      %s214 = smul.addr %s213, 2
      %s215 = smul.addr %s214, 4
      %s216 = scalar_lea.vmem %s0, %s215
      %p217 = pneg %p50
      %p218 = pneg %p47
      %p219 = pneg %p71
      %p220 = pneg %p68
      %p221 = pneg %p92
      %p222 = pneg %p89
      %p223 = pneg %p113
      %p224 = pneg %p110
      %p225 = pneg %p141
      %p226 = pneg %p138
      %s227 = smul.u32 2, %s22
      %p228 = scmp.lt.s32.totalorder %s21, 1
      %s229 = scalar_select %p228, %s21, 1
      %p230 = scmp.lt.s32.totalorder %s227, 1
      %s231 = scalar_select %p230, %s227, 1
      %s232 = smul.addr %s229, 2
      %s233 = sadd.s32 %s231, %s232
      %s234 = smul.addr %s233, 4
      %s235 = scalar_lea.vmem %s4, %s234
      %p236 = pneg %p169
      %p237 = pneg %p166
      %p238 = scmp.lt.s32.totalorder %s21, 1
      %s239 = scalar_select %p238, %s21, 1
      %p240 = scmp.lt.s32.totalorder %s22, 0
      %s241 = scalar_select %p240, %s22, 0
      %s242 = sadd.s32 %s241, %s239
      %s243 = smul.addr %s242, 2
      %s244 = scalar_lea.vmem %s5, %s243
      %p245 = scmp.lt.s32.totalorder %s21, 1
      %s246 = scalar_select %p245, %s21, 1
      %s247 = smul.addr %s246, 2
      %s248 = smul.addr %s247, 4
      %s249 = scalar_lea.vmem %s0, %s248
      %s250 = smul.u32 2, %s22
      %p251 = scmp.lt.s32.totalorder %s21, 1
      %s252 = scalar_select %p251, %s21, 1
      %p253 = scmp.lt.s32.totalorder %s250, 1
      %s254 = scalar_select %p253, %s250, 1
      %s255 = smul.addr %s252, 2
      %s256 = sadd.s32 %s254, %s255
      %s257 = smul.addr %s256, 4
      %s258 = scalar_lea.vmem %s4, %s257
      %s259 = smul.u32 2, %s22
      %p260 = scmp.lt.s32.totalorder %s21, 1
      %s261 = scalar_select %p260, %s21, 1
      %p262 = scmp.lt.s32.totalorder %s22, 0
      %s263 = scalar_select %p262, %s22, 0
      %s264 = sadd.s32 %s263, %s261
      %s265 = smul.addr %s264, 2
      %s266 = scalar_lea.vmem %s5, %s265
      %v268 = vld [vmem:[%s249] sm:$0xf]
      %v269 = vld [vmem:[%s249 + $0x4] sm:$0xf]
      %v270 = vunpack.c.l.bf16 %v268
      %v271 = vunpack.c.l.bf16 %v269
      %v272 = vld [vmem:[%s2] sm:$0x1]
      %v274 = vlaneseq
      %v275 = vshrl.u32 %v274, 7
      %v276 = vsub.s32 0, %v275
      %v277 = vrot.slane %v272, %v276
      %v279 = vmul.f32 %v270, %v277
      %v280 = vmul.f32 %v271, %v277
      %v281 = vld [vmem:[%s3] sm:$0x1]
      %v283 = vlaneseq
      %v284 = vshrl.u32 %v283, 7
      %v285 = vsub.s32 0, %v284
      %v286 = vrot.slane %v281, %v285
      %v288 = vadd.f32 %v279, %v286
      %v289 = vadd.f32 %v280, %v286
      %v290 = vmax.f32 %v288, 0.0
      %v291 = vmax.f32 %v289, 0.0
      %vm294 = vcmask 1040384
      %v295 = vrot.slane %v290, 7
      %v296 = vrot.slane %v291, 7
      %v297 = vsel %vm294, %v295, %v296
      %v300 = vsel %vm294, 0.0, %v295
      %vm301 = vcmask 1046528
      %v302 = vrot.slane %v290, 1
      %v303 = vrot.slane %v291, 1
      %v304 = vsel %vm301, %v302, %v303
      %v307 = vsel %vm301, %v303, 0.0
      %v308 = vpack.c.bf16 %v297, %v300
      %v309 = vld [vmem:[%s1] sm:$0xf]
      %v310 = vld [vmem:[%s1 + $0x4] sm:$0xf]
      %v311 = vld [vmem:[%s1 + $0x8] sm:$0xf]
      %v312 = vld [vmem:[%s1 + $0xc] sm:$0xf]
      %v313 = vld [vmem:[%s1 + $0x10] sm:$0xf]
      %v314 = vld [vmem:[%s1 + $0x14] sm:$0xf]
      %v315 = vld [vmem:[%s1 + $0x18] sm:$0xf]
      %v316 = vld [vmem:[%s1 + $0x1c] sm:$0xf]
      %v317 = vld [vmem:[%s1 + $0x20] sm:$0xf]
      %v318 = vld [vmem:[%s1 + $0x24] sm:$0xf]
      %v319 = vld [vmem:[%s1 + $0x28] sm:$0xf]
      %v320 = vld [vmem:[%s1 + $0x2c] sm:$0xf]
      %v321 = vld [vmem:[%s1 + $0x30] sm:$0xf]
      %v322 = vld [vmem:[%s1 + $0x34] sm:$0xf]
      %v323 = vld [vmem:[%s1 + $0x38] sm:$0xf]
      %v324 = vld [vmem:[%s1 + $0x3c] sm:$0xf]
      %v325 = vpack.c.bf16 %v291, %v290
      %s326 = scalar_lea.vmem %s1, 64
      %v327 = vld [vmem:[%s326] sm:$0xf]
      %v328 = vld [vmem:[%s326 + $0x4] sm:$0xf]
      %v329 = vld [vmem:[%s326 + $0x8] sm:$0xf]
      %v330 = vld [vmem:[%s326 + $0xc] sm:$0xf]
      %v331 = vld [vmem:[%s326 + $0x10] sm:$0xf]
      %v332 = vld [vmem:[%s326 + $0x14] sm:$0xf]
      %v333 = vld [vmem:[%s326 + $0x18] sm:$0xf]
      %v334 = vld [vmem:[%s326 + $0x1c] sm:$0xf]
      %v335 = vld [vmem:[%s326 + $0x20] sm:$0xf]
      %v336 = vld [vmem:[%s326 + $0x24] sm:$0xf]
      %v337 = vld [vmem:[%s326 + $0x28] sm:$0xf]
      %v338 = vld [vmem:[%s326 + $0x2c] sm:$0xf]
      %v339 = vld [vmem:[%s326 + $0x30] sm:$0xf]
      %v340 = vld [vmem:[%s326 + $0x34] sm:$0xf]
      %v341 = vld [vmem:[%s326 + $0x38] sm:$0xf]
      %v342 = vld [vmem:[%s326 + $0x3c] sm:$0xf]
      %v359 = vunpack.c.l.b16 %v327
      %v360 = vunpack.c.l.b16 %v328
      %v361 = vunpack.c.l.b16 %v329
      %v362 = vunpack.c.l.b16 %v330
      %v363 = vunpack.c.l.b16 %v331
      %v364 = vunpack.c.l.b16 %v332
      %v365 = vunpack.c.l.b16 %v333
      %v366 = vunpack.c.l.b16 %v334
      %v367 = vunpack.c.l.b16 %v335
      %v368 = vunpack.c.l.b16 %v336
      %v369 = vunpack.c.l.b16 %v337
      %v370 = vunpack.c.l.b16 %v338
      %v371 = vunpack.c.l.b16 %v339
      %v372 = vunpack.c.l.b16 %v340
      %v373 = vunpack.c.l.b16 %v341
      %v374 = vunpack.c.l.b16 %v342
      %v375 = vpack.c.b16 %v360, %v359
      %v376 = vpack.c.b16 %v362, %v361
      %v377 = vpack.c.b16 %v364, %v363
      %v378 = vpack.c.b16 %v366, %v365
      %v379 = vpack.c.b16 %v368, %v367
      %v380 = vpack.c.b16 %v370, %v369
      %v381 = vpack.c.b16 %v372, %v371
      %v382 = vpack.c.b16 %v374, %v373
      %391 = vmatprep.subr.bf16.mxu0 0
      %392 = vmatpush1.bf16.msra.mxu0 %v375
      %393 = vmatprep.subr.bf16.mxu0 0
      %394 = vmatpush1.bf16.msra.mxu0 %v376
      %395 = vmatprep.subr.bf16.mxu0 0
      %396 = vmatpush1.bf16.msra.mxu0 %v377
      %397 = vmatprep.subr.bf16.mxu0 0
      %398 = vmatpush1.bf16.msra.mxu0 %v378
      %399 = vmatprep.subr.bf16.mxu0 0
      %400 = vmatpush1.bf16.msra.mxu0 %v379
      %401 = vmatprep.subr.bf16.mxu0 0
      %402 = vmatpush1.bf16.msra.mxu0 %v380
      %403 = vmatprep.subr.bf16.mxu0 0
      %404 = vmatpush1.bf16.msra.mxu0 %v381
      %405 = vmatprep.subr.bf16.mxu0 0
      %406 = vmatpush1.bf16.msra.mxu0 %v382
      %407 = vmatprep.subr.bf16.mxu0 0
      %408 = vmatpush1.bf16.msra.mxu0 0
      %409 = vmatprep.subr.bf16.mxu0 0
      %410 = vmatpush1.bf16.msra.mxu0 0
      %411 = vmatprep.subr.bf16.mxu0 0
      %412 = vmatpush1.bf16.msra.mxu0 0
      %413 = vmatprep.subr.bf16.mxu0 0
      %414 = vmatpush1.bf16.msra.mxu0 0
      %415 = vmatprep.subr.bf16.mxu0 0
      %416 = vmatpush1.bf16.msra.mxu0 0
      %417 = vmatprep.subr.bf16.mxu0 0
      %418 = vmatpush1.bf16.msra.mxu0 0
      %419 = vmatprep.subr.bf16.mxu0 0
      %420 = vmatpush1.bf16.msra.mxu0 0
      %421 = vmatprep.subr.bf16.mxu0 0
      %422 = vmatpush1.bf16.msra.mxu0 0
      %423 = vmatprep.mubr.bf16.mxu0 0
      %424 = vmatmul.mubr.bf16.gmra.mrb[0].mxu0 %v325
      %v425 = vpop.f32.mrb[0].mxu0
      %v426 = vadd.f32 0.0, %v425
      %v427 = vpop.f32.mrb[0].mxu0
      %v428 = vpop.f32.mrb[0].mxu0
      %v429 = vadd.f32 0.0, %v428
      %v430 = vpop.f32.mrb[0].mxu0
      %431 = vdwg.mxu0
      %v448 = vunpack.c.l.b16 %v309
      %v449 = vunpack.c.l.b16 %v310
      %v450 = vunpack.c.l.b16 %v311
      %v451 = vunpack.c.l.b16 %v312
      %v452 = vunpack.c.l.b16 %v313
      %v453 = vunpack.c.l.b16 %v314
      %v454 = vunpack.c.l.b16 %v315
      %v455 = vunpack.c.l.b16 %v316
      %v456 = vunpack.c.l.b16 %v317
      %v457 = vunpack.c.l.b16 %v318
      %v458 = vunpack.c.l.b16 %v319
      %v459 = vunpack.c.l.b16 %v320
      %v460 = vunpack.c.l.b16 %v321
      %v461 = vunpack.c.l.b16 %v322
      %v462 = vunpack.c.l.b16 %v323
      %v463 = vunpack.c.l.b16 %v324
      %v464 = vpack.c.b16 %v449, %v448
      %v465 = vpack.c.b16 %v451, %v450
      %v466 = vpack.c.b16 %v453, %v452
      %v467 = vpack.c.b16 %v455, %v454
      %v468 = vpack.c.b16 %v457, %v456
      %v469 = vpack.c.b16 %v459, %v458
      %v470 = vpack.c.b16 %v461, %v460
      %v471 = vpack.c.b16 %v463, %v462
      %480 = vmatprep.subr.bf16.mxu0 0
      %481 = vmatpush1.bf16.msra.mxu0 %v464
      %482 = vmatprep.subr.bf16.mxu0 0
      %483 = vmatpush1.bf16.msra.mxu0 %v465
      %484 = vmatprep.subr.bf16.mxu0 0
      %485 = vmatpush1.bf16.msra.mxu0 %v466
      %486 = vmatprep.subr.bf16.mxu0 0
      %487 = vmatpush1.bf16.msra.mxu0 %v467
      %488 = vmatprep.subr.bf16.mxu0 0
      %489 = vmatpush1.bf16.msra.mxu0 %v468
      %490 = vmatprep.subr.bf16.mxu0 0
      %491 = vmatpush1.bf16.msra.mxu0 %v469
      %492 = vmatprep.subr.bf16.mxu0 0
      %493 = vmatpush1.bf16.msra.mxu0 %v470
      %494 = vmatprep.subr.bf16.mxu0 0
      %495 = vmatpush1.bf16.msra.mxu0 %v471
      %496 = vmatprep.subr.bf16.mxu0 0
      %497 = vmatpush1.bf16.msra.mxu0 0
      %498 = vmatprep.subr.bf16.mxu0 0
      %499 = vmatpush1.bf16.msra.mxu0 0
      %500 = vmatprep.subr.bf16.mxu0 0
      %501 = vmatpush1.bf16.msra.mxu0 0
      %502 = vmatprep.subr.bf16.mxu0 0
      %503 = vmatpush1.bf16.msra.mxu0 0
      %504 = vmatprep.subr.bf16.mxu0 0
      %505 = vmatpush1.bf16.msra.mxu0 0
      %506 = vmatprep.subr.bf16.mxu0 0
      %507 = vmatpush1.bf16.msra.mxu0 0
      %508 = vmatprep.subr.bf16.mxu0 0
      %509 = vmatpush1.bf16.msra.mxu0 0
      %510 = vmatprep.subr.bf16.mxu0 0
      %511 = vmatpush1.bf16.msra.mxu0 0
      %512 = vmatprep.mubr.bf16.mxu0 0
      %513 = vmatmul.mubr.bf16.gmra.mrb[0].mxu0 %v308
      %v514 = vpop.f32.mrb[0].mxu0
      %v515 = vadd.f32 %v426, %v514
      %v516 = vpop.f32.mrb[0].mxu0
      %v517 = vpop.f32.mrb[0].mxu0
      %v518 = vadd.f32 %v429, %v517
      %v519 = vpop.f32.mrb[0].mxu0
      %520 = vdwg.mxu0
      %v521 = vpack.c.bf16 %v307, %v304
      %s522 = scalar_lea.vmem %s1, 128
      %v523 = vld [vmem:[%s522] sm:$0xf]
      %v524 = vld [vmem:[%s522 + $0x4] sm:$0xf]
      %v525 = vld [vmem:[%s522 + $0x8] sm:$0xf]
      %v526 = vld [vmem:[%s522 + $0xc] sm:$0xf]
      %v527 = vld [vmem:[%s522 + $0x10] sm:$0xf]
      %v528 = vld [vmem:[%s522 + $0x14] sm:$0xf]
      %v529 = vld [vmem:[%s522 + $0x18] sm:$0xf]
      %v530 = vld [vmem:[%s522 + $0x1c] sm:$0xf]
      %v531 = vld [vmem:[%s522 + $0x20] sm:$0xf]
      %v532 = vld [vmem:[%s522 + $0x24] sm:$0xf]
      %v533 = vld [vmem:[%s522 + $0x28] sm:$0xf]
      %v534 = vld [vmem:[%s522 + $0x2c] sm:$0xf]
      %v535 = vld [vmem:[%s522 + $0x30] sm:$0xf]
      %v536 = vld [vmem:[%s522 + $0x34] sm:$0xf]
      %v537 = vld [vmem:[%s522 + $0x38] sm:$0xf]
      %v538 = vld [vmem:[%s522 + $0x3c] sm:$0xf]
      %v555 = vunpack.c.l.b16 %v523
      %v556 = vunpack.c.l.b16 %v524
      %v557 = vunpack.c.l.b16 %v525
      %v558 = vunpack.c.l.b16 %v526
      %v559 = vunpack.c.l.b16 %v527
      %v560 = vunpack.c.l.b16 %v528
      %v561 = vunpack.c.l.b16 %v529
      %v562 = vunpack.c.l.b16 %v530
      %v563 = vunpack.c.l.b16 %v531
      %v564 = vunpack.c.l.b16 %v532
      %v565 = vunpack.c.l.b16 %v533
      %v566 = vunpack.c.l.b16 %v534
      %v567 = vunpack.c.l.b16 %v535
      %v568 = vunpack.c.l.b16 %v536
      %v569 = vunpack.c.l.b16 %v537
      %v570 = vunpack.c.l.b16 %v538
      %v571 = vpack.c.b16 %v556, %v555
      %v572 = vpack.c.b16 %v558, %v557
      %v573 = vpack.c.b16 %v560, %v559
      %v574 = vpack.c.b16 %v562, %v561
      %v575 = vpack.c.b16 %v564, %v563
      %v576 = vpack.c.b16 %v566, %v565
      %v577 = vpack.c.b16 %v568, %v567
      %v578 = vpack.c.b16 %v570, %v569
      %587 = vmatprep.subr.bf16.mxu0 0
      %588 = vmatpush1.bf16.msra.mxu0 %v571
      %589 = vmatprep.subr.bf16.mxu0 0
      %590 = vmatpush1.bf16.msra.mxu0 %v572
      %591 = vmatprep.subr.bf16.mxu0 0
      %592 = vmatpush1.bf16.msra.mxu0 %v573
      %593 = vmatprep.subr.bf16.mxu0 0
      %594 = vmatpush1.bf16.msra.mxu0 %v574
      %595 = vmatprep.subr.bf16.mxu0 0
      %596 = vmatpush1.bf16.msra.mxu0 %v575
      %597 = vmatprep.subr.bf16.mxu0 0
      %598 = vmatpush1.bf16.msra.mxu0 %v576
      %599 = vmatprep.subr.bf16.mxu0 0
      %600 = vmatpush1.bf16.msra.mxu0 %v577
      %601 = vmatprep.subr.bf16.mxu0 0
      %602 = vmatpush1.bf16.msra.mxu0 %v578
      %603 = vmatprep.subr.bf16.mxu0 0
      %604 = vmatpush1.bf16.msra.mxu0 0
      %605 = vmatprep.subr.bf16.mxu0 0
      %606 = vmatpush1.bf16.msra.mxu0 0
      %607 = vmatprep.subr.bf16.mxu0 0
      %608 = vmatpush1.bf16.msra.mxu0 0
      %609 = vmatprep.subr.bf16.mxu0 0
      %610 = vmatpush1.bf16.msra.mxu0 0
      %611 = vmatprep.subr.bf16.mxu0 0
      %612 = vmatpush1.bf16.msra.mxu0 0
      %613 = vmatprep.subr.bf16.mxu0 0
      %614 = vmatpush1.bf16.msra.mxu0 0
      %615 = vmatprep.subr.bf16.mxu0 0
      %616 = vmatpush1.bf16.msra.mxu0 0
      %617 = vmatprep.subr.bf16.mxu0 0
      %618 = vmatpush1.bf16.msra.mxu0 0
      %619 = vmatprep.mubr.bf16.mxu0 0
      %620 = vmatmul.mubr.bf16.gmra.mrb[0].mxu0 %v521
      %v621 = vpop.f32.mrb[0].mxu0
      %v622 = vadd.f32 0.0, %v621
      %v623 = vpop.f32.mrb[0].mxu0
      %v624 = vpop.f32.mrb[0].mxu0
      %v625 = vadd.f32 0.0, %v624
      %v626 = vpop.f32.mrb[0].mxu0
      %627 = vdwg.mxu0
      %v628 = vadd.f32 %v515, %v622
      %v629 = vadd.f32 %v518, %v625
      %v630 = vadd.f32 %v628, %v629
      %v631 = vrot.slane %v630, 4
      %v632 = vadd.f32 %v630, %v631
      %v633 = vrot.slane %v632, 2
      %v634 = vadd.f32 %v632, %v633
      %v635 = vrot.slane %v634, 1
      %v636 = vadd.f32 %v634, %v635
      %v637 = vmul.f32 %v628, %v628
      %v638 = vmul.f32 %v629, %v629
      %v639 = vadd.f32 %v637, %v638
      %v640 = vrot.slane %v639, 4
      %v641 = vadd.f32 %v639, %v640
      %v642 = vrot.slane %v641, 2
      %v643 = vadd.f32 %v641, %v642
      %v644 = vrot.slane %v643, 1
      %v645 = vadd.f32 %v643, %v644
      %v646 = vsel %vm294, %v636, %v645
      %647 = vst [vmem:[%s266] sm:$0x3] %v646
      %v648 = vpack.c.bf16 %v629, %v628
      %v650 = vunpack.c.l.b16 %v648
      %v651 = vunpack.c.h.b16 %v648
      %v652 = vpack.c.b16 %v650, %v650
      %v653 = vpack.c.b16 %v651, %v651
      %656 = vst [vmem:[%s258] sm:$0xf] %v652
      %657 = vst [vmem:[%s258 + $0x4] sm:$0xf] %v653
      %s658 = smul.u32 2, %s22
      %p659 = scmp.lt.s32.totalorder %s21, 1
      %s660 = scalar_select %p659, %s21, 1
      %p661 = scmp.lt.s32.totalorder %s658, 1
      %s662 = scalar_select %p661, %s658, 1
      %s663 = smul.addr %s660, 2
      %s664 = sadd.s32 %s662, %s663
      %s665 = smul.addr %s664, 4
      %s666 = scalar_lea.vmem %s4, %s665
      %p667 = scmp.lt.s32.totalorder %s21, 1
      %s668 = scalar_select %p667, %s21, 1
      %p669 = scmp.lt.s32.totalorder %s22, 0
      %s670 = scalar_select %p669, %s22, 0
      %s671 = sadd.s32 %s670, %s668
      %s672 = smul.addr %s671, 2
      %s673 = scalar_lea.vmem %s5, %s672
      // Predicated region
      $region37: #{_lambda_.4} parent=35 // pred_check
        %p674 = pneg %p138
      $region38: #{_lambda_.4} parent=35 // pred_check_branch
        %676 = sbr.rel (%p674) target = $region40
      $region39: #{_lambda_.4} parent=35 // pred_region
        %s677 = smul.u32 2, %s22
      $region40: #{_lambda_.4} parent=35 // pred_fallthru
        _
      // Predicated region
      $region41: #{_lambda_.4} parent=35 // pred_check
        %p678 = pneg %p166
      $region42: #{_lambda_.4} parent=35 // pred_check_branch
        %680 = sbr.rel (%p678) target = $region44
      $region43: #{_lambda_.4} parent=35 // pred_region
        _
      $region44: #{_lambda_.4} parent=35 // pred_fallthru
        _
    $region36: #{_lambda_.4} parent=5 // pred_fallthru
      _
    %p681 = scmp.le.s32.totalorder 2, %s12
    // Predicated region
    $region45: #{_lambda_.4} parent=5 // pred_check
      %p682 = pneg %p681
    $region46: #{_lambda_.4} parent=5 // pred_check_branch
      %684 = sbr.rel (%p682) target = $region48
    $region47: #{_lambda_.4} parent=5 // pred_region
      %s685 = ssub.s32 %s12, 2
      // Predicated region
      $region49: #{_lambda_.4} parent=47 // pred_check
        %p686 = pneg %p144
      $region50: #{_lambda_.4} parent=47 // pred_check_branch
        %688 = sbr.rel (%p686) target = $region52
      $region51: #{_lambda_.4} parent=47 // pred_region
        %s689 = smul.u32 2, %s24
        %p690 = scmp.lt.s32.totalorder %s23, 1
        %s691 = scalar_select %p690, %s23, 1
        %p692 = scmp.lt.s32.totalorder %s689, 1
        %s693 = scalar_select %p692, %s689, 1
        %s694 = smul.addr %s691, 2
        %s695 = sadd.s32 %s693, %s694
        %s696 = smul.addr %s695, 4
        %s697 = scalar_lea.vmem %s4, %s696
      $region52: #{_lambda_.4} parent=47 // pred_fallthru
        _
      // Predicated region
      $region53: #{_lambda_.4} parent=47 // pred_check
        %p698 = pneg %p172
      $region54: #{_lambda_.4} parent=47 // pred_check_branch
        %700 = sbr.rel (%p698) target = $region56
      $region55: #{_lambda_.4} parent=47 // pred_region
        %p701 = scmp.lt.s32.totalorder %s23, 1
        %s702 = scalar_select %p701, %s23, 1
        %p703 = scmp.lt.s32.totalorder %s24, 0
        %s704 = scalar_select %p703, %s24, 0
        %s705 = sadd.s32 %s704, %s702
        %s706 = smul.addr %s705, 2
        %s707 = scalar_lea.vmem %s5, %s706
      $region56: #{_lambda_.4} parent=47 // pred_fallthru
        _
    $region48: #{_lambda_.4} parent=5 // pred_fallthru
      _
  $region6: #{_lambda_.4} parent=0 // loop_footer
    %s16 = sadd.s32 1, %s12
  $region7: #{_lambda_.4} parent=0 // loop_footer_branch
    %11 = sbr.rel target = $region3
  $region8: #{_lambda_.4} parent=0 // loop_exit
    _

// kernel: _lambda_.5
$region0: #{_lambda_.5}
  #allocation0 [shape = 'u32[]', space=smem, size = 0x4, offset = 0x4, fixed_abs, tag = 'smem constant byte address 0x4 - core index']
  #allocation1 [shape = 'u32[144,128]{1,0:T(1,128)}', space=vmem, size = 0x12000, scoped, tag = 'internal scratch']
  %s0 = inlined_call_operand.vmem [shape: bf16[2,16,128], index: 0, kind: input, shape index: {}]
  %s1 = inlined_call_operand.vmem [shape: f32[1,128], index: 1, kind: input, shape index: {}]
  %s2 = inlined_call_operand.vmem [shape: f32[1,128], index: 2, kind: input, shape index: {}]
  %s3 = inlined_call_operand.vmem [shape: f32[2,16,128], index: 3, kind: output, shape index: {}]
  %s4 = sld [smem:[#allocation0]]
  $region45: #{_lambda_.5} parent=0
    _
  %s6 = ssub.s32 1, %s4
  %s7 = scalar_select 0, %s6, %s4
  loop: start=0, step=1, limit=4
  $region2: #{_lambda_.5} parent=0 // loop_pre_header
    _
  $region3: #{_lambda_.5} parent=0 // loop_header
    %s9 = sphi 0, %s13
    %p10 = scmp.ge.s32.totalorder %s9, 4
    %s16 = sphi 0, %s28
    %s17 = sphi 0, %s24
    %s18 = sphi 0, %s16
    %s19 = sphi 0, %s17
    %s20 = sphi 0, %s18
    %s21 = sphi 0, %s19
    %s33 = sphi 0, %s35
    %s36 = sphi 0, %s33
    %s37 = sphi 0, %s36
    %s53 = sphi 0, %s37
    %s57 = sphi 0, %s57
    %s59 = sphi 0, %s57
    %s60 = sphi 0, %s59
    %s74 = sphi 0, %s60
    %s78 = sphi 0, %s78
    %s80 = sphi 0, %s78
    %s81 = sphi 0, %s80
    %s95 = sphi 0, %s81
    %s103 = sphi 0, %s105
    %s106 = sphi 0, %s103
    %s107 = sphi 0, %s106
    %s123 = sphi 0, %s107
  $region4: #{_lambda_.5} parent=0 // loop_header_branch
    %12 = sbr.rel (%p10) target = $region8
  $region5: #{_lambda_.5} parent=0 // loop_body
    %s14 = ssub.s32 %s9, 1
    %s15 = ssub.s32 %s9, 2
    %s22 = sadd.s32 1, %s17
    %p23 = scmp.ge.s32.totalorder %s22, 1
    %s24 = scalar_select %p23, 0, %s22
    %s25 = sadd.s32 1, %s16
    %s26 = scalar_select %p23, %s25, %s16
    %p27 = scmp.ge.s32.totalorder %s26, 2
    %s28 = scalar_select %p27, 0, %s26
    %s29 = ssub.s32 %s16, %s28
    %s30 = ssub.s32 %s17, %s24
    %s31 = sor.u32 %s29, %s30
    %p32 = scmp.eq.s32.totalorder %s31, 0
    %s34 = sadd.s32 %s33, 1
    %s35 = scalar_select %p32, %s33, %s34
    %p38 = pneg %p32
    %p39 = scmp.eq.s32.totalorder %s9, 1
    %p40 = por %p38, %p39
    %p41 = scmp.ne.s32.totalorder %s33, %s36
    %p42 = scmp.eq.s32.totalorder %s9, 0
    %p43 = por %p41, %p42
    %p44 = scmp.ne.s32.totalorder %s33, %s36
    %p45 = scmp.eq.s32.totalorder %s14, 1
    %p46 = por %p44, %p45
    %p47 = scmp.ne.s32.totalorder %s36, %s37
    %p48 = scmp.eq.s32.totalorder %s14, 0
    %p49 = por %p47, %p48
    %p50 = scmp.ne.s32.totalorder %s36, %s37
    %p51 = scmp.eq.s32.totalorder %s15, 1
    %p52 = por %p50, %p51
    %p54 = scmp.ne.s32.totalorder %s37, %s53
    %p55 = scmp.eq.s32.totalorder %s15, 0
    %p56 = por %p54, %p55
    %s58 = sadd.s32 %s57, 1
    %p61 = scmp.eq.s32.totalorder %s9, 1
    %p62 = scmp.ne.s32.totalorder %s57, %s59
    %p63 = scmp.eq.s32.totalorder %s9, 0
    %p64 = por %p62, %p63
    %p65 = scmp.ne.s32.totalorder %s57, %s59
    %p66 = scmp.eq.s32.totalorder %s14, 1
    %p67 = por %p65, %p66
    %p68 = scmp.ne.s32.totalorder %s59, %s60
    %p69 = scmp.eq.s32.totalorder %s14, 0
    %p70 = por %p68, %p69
    %p71 = scmp.ne.s32.totalorder %s59, %s60
    %p72 = scmp.eq.s32.totalorder %s15, 1
    %p73 = por %p71, %p72
    %p75 = scmp.ne.s32.totalorder %s60, %s74
    %p76 = scmp.eq.s32.totalorder %s15, 0
    %p77 = por %p75, %p76
    %s79 = sadd.s32 %s78, 1
    %p82 = scmp.eq.s32.totalorder %s9, 1
    %p83 = scmp.ne.s32.totalorder %s78, %s80
    %p84 = scmp.eq.s32.totalorder %s9, 0
    %p85 = por %p83, %p84
    %p86 = scmp.ne.s32.totalorder %s78, %s80
    %p87 = scmp.eq.s32.totalorder %s14, 1
    %p88 = por %p86, %p87
    %p89 = scmp.ne.s32.totalorder %s80, %s81
    %p90 = scmp.eq.s32.totalorder %s14, 0
    %p91 = por %p89, %p90
    %p92 = scmp.ne.s32.totalorder %s80, %s81
    %p93 = scmp.eq.s32.totalorder %s15, 1
    %p94 = por %p92, %p93
    %p96 = scmp.ne.s32.totalorder %s81, %s95
    %p97 = scmp.eq.s32.totalorder %s15, 0
    %p98 = por %p96, %p97
    %s99 = ssub.s32 %s16, %s28
    %s100 = ssub.s32 %s17, %s24
    %s101 = sor.u32 %s99, %s100
    %p102 = scmp.eq.s32.totalorder %s101, 0
    %s104 = sadd.s32 %s103, 1
    %s105 = scalar_select %p102, %s103, %s104
    %p108 = pneg %p102
    %p109 = scmp.eq.s32.totalorder %s9, 1
    %p110 = por %p108, %p109
    %p111 = scmp.ne.s32.totalorder %s103, %s106
    %p112 = scmp.eq.s32.totalorder %s9, 0
    %p113 = por %p111, %p112
    %p114 = scmp.ne.s32.totalorder %s103, %s106
    %p115 = scmp.eq.s32.totalorder %s14, 1
    %p116 = por %p114, %p115
    %p117 = scmp.ne.s32.totalorder %s106, %s107
    %p118 = scmp.eq.s32.totalorder %s14, 0
    %p119 = por %p117, %p118
    %p120 = scmp.ne.s32.totalorder %s106, %s107
    %p121 = scmp.eq.s32.totalorder %s15, 1
    %p122 = por %p120, %p121
    %p124 = scmp.ne.s32.totalorder %s107, %s123
    %p125 = scmp.eq.s32.totalorder %s15, 0
    %p126 = por %p124, %p125
    %p127 = scmp.le.s32.totalorder 1, %s9
    %p128 = scmp.lt.s32.totalorder %s9, 3
    %p129 = pnand %p127, %p128
    %p130 = pneg %p129
    // Predicated region
    $region9: #{_lambda_.5} parent=5 // pred_check
      _
    $region10: #{_lambda_.5} parent=5 // pred_check_branch
      %132 = sbr.rel (%p129) target = $region12
    $region11: #{_lambda_.5} parent=5 // pred_region
      %s133 = ssub.s32 %s9, 1
      // Predicated region
      $region13: #{_lambda_.5} parent=11 // pred_check
        %p134 = pneg %p70
      $region14: #{_lambda_.5} parent=11 // pred_check_branch
        %136 = sbr.rel (%p134) target = $region16
      $region15: #{_lambda_.5} parent=11 // pred_region
        _
      $region16: #{_lambda_.5} parent=11 // pred_fallthru
        _
      // Predicated region
      $region17: #{_lambda_.5} parent=11 // pred_check
        %p137 = pneg %p91
      $region18: #{_lambda_.5} parent=11 // pred_check_branch
        %139 = sbr.rel (%p137) target = $region20
      $region19: #{_lambda_.5} parent=11 // pred_region
        _
      $region20: #{_lambda_.5} parent=11 // pred_fallthru
        _
    $region12: #{_lambda_.5} parent=5 // pred_fallthru
      _
    %p140 = scmp.lt.s32.totalorder %s9, 2
    // Predicated region
    $region21: #{_lambda_.5} parent=5 // pred_check
      %p141 = pneg %p140
    $region22: #{_lambda_.5} parent=5 // pred_check_branch
      %143 = sbr.rel (%p141) target = $region24
    $region23: #{_lambda_.5} parent=5 // pred_region
      // Predicated region
      $region25: #{_lambda_.5} parent=23 // pred_check
        %p144 = pneg %p43
      $region26: #{_lambda_.5} parent=23 // pred_check_branch
        %146 = sbr.rel (%p144) target = $region28
      $region27: #{_lambda_.5} parent=23 // pred_region
        %s147 = smul.u32 2, %s17
        %p148 = scmp.lt.s32.totalorder %s16, 1
        %s149 = scalar_select %p148, %s16, 1
        %p150 = scmp.lt.s32.totalorder %s147, 1
        %s151 = scalar_select %p150, %s147, 1
        %s152 = smul.addr %s149, 2
        %s153 = sadd.s32 %s151, %s152
        %s154 = smul.addr %s153, 4
        %s155 = scalar_lea.vmem %s0, %s154
        %s156 = smul.u32 2, %s17
      $region28: #{_lambda_.5} parent=23 // pred_fallthru
        _
    $region24: #{_lambda_.5} parent=5 // pred_fallthru
      _
    %p157 = scmp.le.s32.totalorder 1, %s9
    %p158 = scmp.lt.s32.totalorder %s9, 3
    %p159 = pnand %p157, %p158
    %p160 = pneg %p159
    // Predicated region
    $region29: #{_lambda_.5} parent=5 // pred_check
      _
    $region30: #{_lambda_.5} parent=5 // pred_check_branch
      %162 = sbr.rel (%p159) target = $region32
    $region31: #{_lambda_.5} parent=5 // pred_region
      %s163 = ssub.s32 %s9, 1
      %s164 = smul.u32 2, %s19
      %p165 = scmp.lt.s32.totalorder %s18, 1
      %s166 = scalar_select %p165, %s18, 1
      %p167 = scmp.lt.s32.totalorder %s164, 1
      %s168 = scalar_select %p167, %s164, 1
      %s169 = smul.addr %s166, 2
      %s170 = sadd.s32 %s168, %s169
      %s171 = smul.addr %s170, 4
      %s172 = scalar_lea.vmem %s0, %s171
      %p173 = pneg %p49
      %p174 = pneg %p46
      %p175 = pneg %p70
      %p176 = pneg %p67
      %p177 = pneg %p91
      %p178 = pneg %p88
      %p179 = pneg %p119
      %p180 = pneg %p116
      %s181 = smul.u32 2, %s19
      %p182 = scmp.lt.s32.totalorder %s18, 1
      %s183 = scalar_select %p182, %s18, 1
      %p184 = scmp.lt.s32.totalorder %s181, 1
      %s185 = scalar_select %p184, %s181, 1
      %s186 = smul.addr %s183, 2
      %s187 = sadd.s32 %s185, %s186
      %s188 = smul.addr %s187, 8
      %s189 = scalar_lea.vmem %s3, %s188
      %s190 = smul.u32 2, %s19
      %p191 = scmp.lt.s32.totalorder %s18, 1
      %s192 = scalar_select %p191, %s18, 1
      %p193 = scmp.lt.s32.totalorder %s190, 1
      %s194 = scalar_select %p193, %s190, 1
      %s195 = smul.addr %s192, 2
      %s196 = sadd.s32 %s194, %s195
      %s197 = smul.addr %s196, 4
      %s198 = scalar_lea.vmem %s0, %s197
      %s199 = smul.u32 2, %s19
      %s200 = smul.u32 2, %s19
      %p201 = scmp.lt.s32.totalorder %s18, 1
      %s202 = scalar_select %p201, %s18, 1
      %p203 = scmp.lt.s32.totalorder %s200, 1
      %s204 = scalar_select %p203, %s200, 1
      %s205 = smul.addr %s202, 2
      %s206 = sadd.s32 %s204, %s205
      %s207 = smul.addr %s206, 8
      %s208 = scalar_lea.vmem %s3, %s207
      %s209 = smul.u32 2, %s19
      %v210 = vld [vmem:[%s198] sm:$0xf]
      %v211 = vld [vmem:[%s198 + $0x4] sm:$0xf]
      %v212 = vunpack.c.l.bf16 %v210
      %v213 = vunpack.c.l.bf16 %v211
      %v214 = vld [vmem:[%s1] sm:$0x1]
      %v216 = vlaneseq
      %v217 = vshrl.u32 %v216, 7
      %v218 = vsub.s32 0, %v217
      %v219 = vrot.slane %v214, %v218
      %v221 = vmul.f32 %v212, %v219
      %v222 = vmul.f32 %v213, %v219
      %v223 = vld [vmem:[%s2] sm:$0x1]
      %v225 = vlaneseq
      %v226 = vshrl.u32 %v225, 7
      %v227 = vsub.s32 0, %v226
      %v228 = vrot.slane %v223, %v227
      %v230 = vadd.f32 %v221, %v228
      %v231 = vadd.f32 %v222, %v228
      %v232 = vmax.f32 %v230, 0.0
      %v233 = vmax.f32 %v231, 0.0
      %234 = vst [vmem:[%s208] sm:$0xff] %v232
      %235 = vst [vmem:[%s208 + $0x8] sm:$0xff] %v233
      %s236 = smul.u32 2, %s19
      %p237 = scmp.lt.s32.totalorder %s18, 1
      %s238 = scalar_select %p237, %s18, 1
      %p239 = scmp.lt.s32.totalorder %s236, 1
      %s240 = scalar_select %p239, %s236, 1
      %s241 = smul.addr %s238, 2
      %s242 = sadd.s32 %s240, %s241
      %s243 = smul.addr %s242, 8
      %s244 = scalar_lea.vmem %s3, %s243
      // Predicated region
      $region33: #{_lambda_.5} parent=31 // pred_check
        %p245 = pneg %p116
      $region34: #{_lambda_.5} parent=31 // pred_check_branch
        %247 = sbr.rel (%p245) target = $region36
      $region35: #{_lambda_.5} parent=31 // pred_region
        %s248 = smul.u32 2, %s19
      $region36: #{_lambda_.5} parent=31 // pred_fallthru
        _
    $region32: #{_lambda_.5} parent=5 // pred_fallthru
      _
    %p249 = scmp.le.s32.totalorder 2, %s9
    // Predicated region
    $region37: #{_lambda_.5} parent=5 // pred_check
      %p250 = pneg %p249
    $region38: #{_lambda_.5} parent=5 // pred_check_branch
      %252 = sbr.rel (%p250) target = $region40
    $region39: #{_lambda_.5} parent=5 // pred_region
      %s253 = ssub.s32 %s9, 2
      // Predicated region
      $region41: #{_lambda_.5} parent=39 // pred_check
        %p254 = pneg %p122
      $region42: #{_lambda_.5} parent=39 // pred_check_branch
        %256 = sbr.rel (%p254) target = $region44
      $region43: #{_lambda_.5} parent=39 // pred_region
        %s257 = smul.u32 2, %s21
        %p258 = scmp.lt.s32.totalorder %s20, 1
        %s259 = scalar_select %p258, %s20, 1
        %p260 = scmp.lt.s32.totalorder %s257, 1
        %s261 = scalar_select %p260, %s257, 1
        %s262 = smul.addr %s259, 2
        %s263 = sadd.s32 %s261, %s262
        %s264 = smul.addr %s263, 8
        %s265 = scalar_lea.vmem %s3, %s264
      $region44: #{_lambda_.5} parent=39 // pred_fallthru
        _
    $region40: #{_lambda_.5} parent=5 // pred_fallthru
      _
  $region6: #{_lambda_.5} parent=0 // loop_footer
    %s13 = sadd.s32 1, %s9
  $region7: #{_lambda_.5} parent=0 // loop_footer_branch
    %8 = sbr.rel target = $region3
  $region8: #{_lambda_.5} parent=0 // loop_exit
    _

</llo_original>
